<compile_context>
chip_gen: v7x
topology: tpu7x:2x2x1
jax: 0.10.0
libtpu: 0.0.40
codegen_flags: <defaults>
</compile_context>

<pallas_src>
import jax
import jax.numpy as jnp
from jax import lax
from jax.experimental import pallas as pl
from jax.experimental.pallas import tpu as pltpu


def make_ode_kernel(n_steps: int):
    """Build the kernel body with a static number of RK4 steps."""
    inv_n = 1.0 / float(n_steps)
    # Full unroll for short chains; bound instruction memory / live ranges
    # for long ones (chain is serial, so no scheduling benefit past that).
    unroll = True if n_steps <= 64 else 8

    def ode_kernel(t_ref, x_ref, wt_ref, b_ref, o_ref):
        # t_ref  : SMEM, shape (2,)   -> integration endpoints t[0], t[1]
        # x_ref  : VMEM, shape (B, H) -> initial state
        # wt_ref : VMEM, shape (H, H) -> W.T (pre-transposed; y = x @ wt)
        # b_ref  : VMEM, shape (1, H) -> bias row
        # o_ref  : VMEM, shape (B, H) -> state at t[1]
        t0 = t_ref[0]
        t1 = t_ref[1]
        dt = (t1 - t0) * jnp.float32(inv_n)          # mul, not divide

        wt = wt_ref[...]
        x = x_ref[...]
        shp = x.shape

        # Hoisted, pre-broadcast vector constants (done once, not per stage).
        half_dt_v = jnp.full(shp, 0.5 * dt, jnp.float32)
        dt_v = jnp.full(shp, dt, jnp.float32)
        dt6_v = jnp.full(shp, dt * jnp.float32(1.0 / 6.0), jnp.float32)
        b_full = jnp.broadcast_to(b_ref[...], shp)

        def mm(v):
            # v @ W.T, with W.T already resident row-major -> plain MXU dot,
            # no per-stage transpose possible.
            return jnp.dot(v, wt, preferred_element_type=jnp.float32)

        def rk4_step(_, xs):
            # Shared affine term: f(x + c*k) = tanh(z + c*(k @ W.T)),
            # z = x @ W.T + b (Linear is autonomous in t).
            z = mm(xs) + b_full
            k1 = jnp.tanh(z)
            k2 = jnp.tanh(z + half_dt_v * mm(k1))
            k3 = jnp.tanh(z + half_dt_v * mm(k2))
            s = k2 + k3
            pre = k1 + (s + s)                       # independent of k4
            k4 = jnp.tanh(z + dt_v * mm(k3))
            return xs + dt6_v * (pre + k4)

        x = lax.fori_loop(0, n_steps, rk4_step, x, unroll=unroll)
        o_ref[...] = x

    return ode_kernel


def ode_net_forward(t, x, W, b, *, n_steps):
    """Pallas-backed equivalent of ODE_Net.forward(t, x).

    t : (2,)   float32 — integration time points [t0, t1]
    x : (B, H) float32 — initial hidden state
    W : (H, H) float32 — Linear weight (PyTorch convention: y = x @ W.T + b)
    b : (H,)   float32 — Linear bias
    returns (B, H) float32 — state at t[1]
    """
    B, H = x.shape
    t = jnp.asarray(t, jnp.float32)
    x = jnp.asarray(x, jnp.float32)
    Wt = jnp.asarray(W, jnp.float32).T               # one-time 32x32 transpose
    b2 = jnp.asarray(b, jnp.float32).reshape(1, H)

    kernel = make_ode_kernel(n_steps)
    # Problem fits entirely in VMEM (a few KiB): gridless call, all operands
    # resident.  No BlockSpec tiling / vmem_limit needed on any generation.
    # A batch grid (parallel, for v7x's 2 TCs) only pays off at much larger B.
    return pl.pallas_call(
        kernel,
        out_shape=jax.ShapeDtypeStruct((B, H), jnp.float32),
        in_specs=[
            pl.BlockSpec(memory_space=pltpu.MemorySpace.SMEM),   # t (scalars)
            pl.BlockSpec(memory_space=pltpu.MemorySpace.VMEM),   # x
            pl.BlockSpec(memory_space=pltpu.MemorySpace.VMEM),   # W.T
            pl.BlockSpec(memory_space=pltpu.MemorySpace.VMEM),   # b
        ],
        out_specs=pl.BlockSpec(memory_space=pltpu.MemorySpace.VMEM),
    )(t, x, Wt, b2)


if __name__ == "__main__":
    # Small, deterministic configuration consistent with the module:
    #   hidden_layer_size = 32, N (integration steps) = 8, batch = 8
    H = 32
    N = 8
    B = 8

    key = jax.random.PRNGKey(0)
    k_w, k_b, k_x = jax.random.split(key, 3)

    # PyTorch nn.Linear default init: U(-1/sqrt(H), 1/sqrt(H))
    bound = 1.0 / jnp.sqrt(jnp.float32(H))
    W = jax.random.uniform(k_w, (H, H), jnp.float32, -bound, bound)
    b = jax.random.uniform(k_b, (H,), jnp.float32, -bound, bound)

    x0 = jax.random.normal(k_x, (B, H), jnp.float32)
    t = jnp.array([0.0, 1.0], jnp.float32)

    out = ode_net_forward(t, x0, W, b, n_steps=N)
    out = jax.block_until_ready(out)

    # Pure-JAX reference (same fixed-step RK4, original un-hoisted
    # formulation matching the PyTorch Linear) for a sanity check.
    def f_ref(x):
        return jnp.tanh(x @ W.T + b)

    def rk4_ref(x, dt, steps):
        for _ in range(steps):
            k1 = f_ref(x)
            k2 = f_ref(x + 0.5 * dt * k1)
            k3 = f_ref(x + 0.5 * dt * k2)
            k4 = f_ref(x + dt * k3)
            x = x + (dt / 6.0) * (k1 + 2 * k2 + 2 * k3 + k4)
        return x

    ref = rk4_ref(x0, (t[1] - t[0]) / N, N)
    assert out.shape == (B, H)
    assert jnp.max(jnp.abs(out - ref)) < 1e-5

    print("KERNEL_OK")
</pallas_src>

<mosaic_0001>
module attributes {stable_mosaic.version = 11 : i64} {
  func.func @ode_kernel(%arg0: memref<2xf32, #tpu.memory_space<smem>>, %arg1: memref<8x32xf32, #tpu.memory_space<vmem>>, %arg2: memref<32x32xf32, #tpu.memory_space<vmem>>, %arg3: memref<1x32xf32, #tpu.memory_space<vmem>>, %arg4: memref<8x32xf32, #tpu.memory_space<vmem>>) attributes {dimension_semantics = [], scalar_prefetch = 0 : i64, scratch_operands = 0 : i64, tpu.core_type = #tpu.core_type<tc>} {
    %c0 = arith.constant 0 : index
    %0 = memref.load %arg0[%c0] : memref<2xf32, #tpu.memory_space<smem>>
    %c1 = arith.constant 1 : index
    %1 = memref.load %arg0[%c1] : memref<2xf32, #tpu.memory_space<smem>>
    %2 = arith.subf %1, %0 : f32
    %cst = arith.constant 1.250000e-01 : f32
    %3 = arith.mulf %2, %cst : f32
    %c0_0 = arith.constant 0 : index
    %c0_1 = arith.constant 0 : index
    %4 = vector.load %arg2[%c0_0, %c0_1] : memref<32x32xf32, #tpu.memory_space<vmem>>, vector<32x32xf32>
    %c0_2 = arith.constant 0 : index
    %c0_3 = arith.constant 0 : index
    %5 = vector.load %arg1[%c0_2, %c0_3] : memref<8x32xf32, #tpu.memory_space<vmem>>, vector<8x32xf32>
    %cst_4 = arith.constant 5.000000e-01 : f32
    %6 = arith.mulf %cst_4, %3 : f32
    %7 = vector.broadcast %6 : f32 to vector<8x32xf32>
    %8 = vector.broadcast %3 : f32 to vector<8x32xf32>
    %cst_5 = arith.constant 0.166666672 : f32
    %9 = arith.mulf %3, %cst_5 : f32
    %10 = vector.broadcast %9 : f32 to vector<8x32xf32>
    %c0_6 = arith.constant 0 : index
    %c0_7 = arith.constant 0 : index
    %11 = vector.load %arg3[%c0_6, %c0_7] : memref<1x32xf32, #tpu.memory_space<vmem>>, vector<1x32xf32>
    %12 = vector.shape_cast %11 : vector<1x32xf32> to vector<1x32xf32>
    %13 = vector.broadcast %12 : vector<1x32xf32> to vector<8x32xf32>
    %c0_i32 = arith.constant 0 : i32
    %cst_8 = arith.constant dense<0.000000e+00> : vector<8x32xf32>
    %14 = tpu.matmul %5, %4, %cst_8 {dimension_numbers = #tpu.dot_dimension_numbers<[1], [0], [0], [1], [0, 0, 1, 1], [], []>} : vector<8x32xf32>, vector<32x32xf32>, vector<8x32xf32> -> vector<8x32xf32>
    %15 = arith.addf %14, %13 : vector<8x32xf32>
    %16 = math.tanh %15 : vector<8x32xf32>
    %cst_9 = arith.constant dense<0.000000e+00> : vector<8x32xf32>
    %17 = tpu.matmul %16, %4, %cst_9 {dimension_numbers = #tpu.dot_dimension_numbers<[1], [0], [0], [1], [0, 0, 1, 1], [], []>} : vector<8x32xf32>, vector<32x32xf32>, vector<8x32xf32> -> vector<8x32xf32>
    %18 = arith.mulf %7, %17 : vector<8x32xf32>
    %19 = arith.addf %15, %18 : vector<8x32xf32>
    %20 = math.tanh %19 : vector<8x32xf32>
    %cst_10 = arith.constant dense<0.000000e+00> : vector<8x32xf32>
    %21 = tpu.matmul %20, %4, %cst_10 {dimension_numbers = #tpu.dot_dimension_numbers<[1], [0], [0], [1], [0, 0, 1, 1], [], []>} : vector<8x32xf32>, vector<32x32xf32>, vector<8x32xf32> -> vector<8x32xf32>
    %22 = arith.mulf %7, %21 : vector<8x32xf32>
    %23 = arith.addf %15, %22 : vector<8x32xf32>
    %24 = math.tanh %23 : vector<8x32xf32>
    %25 = arith.addf %20, %24 : vector<8x32xf32>
    %26 = arith.addf %25, %25 : vector<8x32xf32>
    %27 = arith.addf %16, %26 : vector<8x32xf32>
    %cst_11 = arith.constant dense<0.000000e+00> : vector<8x32xf32>
    %28 = tpu.matmul %24, %4, %cst_11 {dimension_numbers = #tpu.dot_dimension_numbers<[1], [0], [0], [1], [0, 0, 1, 1], [], []>} : vector<8x32xf32>, vector<32x32xf32>, vector<8x32xf32> -> vector<8x32xf32>
    %29 = arith.mulf %8, %28 : vector<8x32xf32>
    %30 = arith.addf %15, %29 : vector<8x32xf32>
    %31 = math.tanh %30 : vector<8x32xf32>
    %32 = arith.addf %27, %31 : vector<8x32xf32>
    %33 = arith.mulf %10, %32 : vector<8x32xf32>
    %34 = arith.addf %5, %33 : vector<8x32xf32>
    %c1_i32 = arith.constant 1 : i32
    %cst_12 = arith.constant dense<0.000000e+00> : vector<8x32xf32>
    %35 = tpu.matmul %34, %4, %cst_12 {dimension_numbers = #tpu.dot_dimension_numbers<[1], [0], [0], [1], [0, 0, 1, 1], [], []>} : vector<8x32xf32>, vector<32x32xf32>, vector<8x32xf32> -> vector<8x32xf32>
    %36 = arith.addf %35, %13 : vector<8x32xf32>
    %37 = math.tanh %36 : vector<8x32xf32>
    %cst_13 = arith.constant dense<0.000000e+00> : vector<8x32xf32>
    %38 = tpu.matmul %37, %4, %cst_13 {dimension_numbers = #tpu.dot_dimension_numbers<[1], [0], [0], [1], [0, 0, 1, 1], [], []>} : vector<8x32xf32>, vector<32x32xf32>, vector<8x32xf32> -> vector<8x32xf32>
    %39 = arith.mulf %7, %38 : vector<8x32xf32>
    %40 = arith.addf %36, %39 : vector<8x32xf32>
    %41 = math.tanh %40 : vector<8x32xf32>
    %cst_14 = arith.constant dense<0.000000e+00> : vector<8x32xf32>
    %42 = tpu.matmul %41, %4, %cst_14 {dimension_numbers = #tpu.dot_dimension_numbers<[1], [0], [0], [1], [0, 0, 1, 1], [], []>} : vector<8x32xf32>, vector<32x32xf32>, vector<8x32xf32> -> vector<8x32xf32>
    %43 = arith.mulf %7, %42 : vector<8x32xf32>
    %44 = arith.addf %36, %43 : vector<8x32xf32>
    %45 = math.tanh %44 : vector<8x32xf32>
    %46 = arith.addf %41, %45 : vector<8x32xf32>
    %47 = arith.addf %46, %46 : vector<8x32xf32>
    %48 = arith.addf %37, %47 : vector<8x32xf32>
    %cst_15 = arith.constant dense<0.000000e+00> : vector<8x32xf32>
    %49 = tpu.matmul %45, %4, %cst_15 {dimension_numbers = #tpu.dot_dimension_numbers<[1], [0], [0], [1], [0, 0, 1, 1], [], []>} : vector<8x32xf32>, vector<32x32xf32>, vector<8x32xf32> -> vector<8x32xf32>
    %50 = arith.mulf %8, %49 : vector<8x32xf32>
    %51 = arith.addf %36, %50 : vector<8x32xf32>
    %52 = math.tanh %51 : vector<8x32xf32>
    %53 = arith.addf %48, %52 : vector<8x32xf32>
    %54 = arith.mulf %10, %53 : vector<8x32xf32>
    %55 = arith.addf %34, %54 : vector<8x32xf32>
    %c2_i32 = arith.constant 2 : i32
    %cst_16 = arith.constant dense<0.000000e+00> : vector<8x32xf32>
    %56 = tpu.matmul %55, %4, %cst_16 {dimension_numbers = #tpu.dot_dimension_numbers<[1], [0], [0], [1], [0, 0, 1, 1], [], []>} : vector<8x32xf32>, vector<32x32xf32>, vector<8x32xf32> -> vector<8x32xf32>
    %57 = arith.addf %56, %13 : vector<8x32xf32>
    %58 = math.tanh %57 : vector<8x32xf32>
    %cst_17 = arith.constant dense<0.000000e+00> : vector<8x32xf32>
    %59 = tpu.matmul %58, %4, %cst_17 {dimension_numbers = #tpu.dot_dimension_numbers<[1], [0], [0], [1], [0, 0, 1, 1], [], []>} : vector<8x32xf32>, vector<32x32xf32>, vector<8x32xf32> -> vector<8x32xf32>
    %60 = arith.mulf %7, %59 : vector<8x32xf32>
    %61 = arith.addf %57, %60 : vector<8x32xf32>
    %62 = math.tanh %61 : vector<8x32xf32>
    %cst_18 = arith.constant dense<0.000000e+00> : vector<8x32xf32>
    %63 = tpu.matmul %62, %4, %cst_18 {dimension_numbers = #tpu.dot_dimension_numbers<[1], [0], [0], [1], [0, 0, 1, 1], [], []>} : vector<8x32xf32>, vector<32x32xf32>, vector<8x32xf32> -> vector<8x32xf32>
    %64 = arith.mulf %7, %63 : vector<8x32xf32>
    %65 = arith.addf %57, %64 : vector<8x32xf32>
    %66 = math.tanh %65 : vector<8x32xf32>
    %67 = arith.addf %62, %66 : vector<8x32xf32>
    %68 = arith.addf %67, %67 : vector<8x32xf32>
    %69 = arith.addf %58, %68 : vector<8x32xf32>
    %cst_19 = arith.constant dense<0.000000e+00> : vector<8x32xf32>
    %70 = tpu.matmul %66, %4, %cst_19 {dimension_numbers = #tpu.dot_dimension_numbers<[1], [0], [0], [1], [0, 0, 1, 1], [], []>} : vector<8x32xf32>, vector<32x32xf32>, vector<8x32xf32> -> vector<8x32xf32>
    %71 = arith.mulf %8, %70 : vector<8x32xf32>
    %72 = arith.addf %57, %71 : vector<8x32xf32>
    %73 = math.tanh %72 : vector<8x32xf32>
    %74 = arith.addf %69, %73 : vector<8x32xf32>
    %75 = arith.mulf %10, %74 : vector<8x32xf32>
    %76 = arith.addf %55, %75 : vector<8x32xf32>
    %c3_i32 = arith.constant 3 : i32
    %cst_20 = arith.constant dense<0.000000e+00> : vector<8x32xf32>
    %77 = tpu.matmul %76, %4, %cst_20 {dimension_numbers = #tpu.dot_dimension_numbers<[1], [0], [0], [1], [0, 0, 1, 1], [], []>} : vector<8x32xf32>, vector<32x32xf32>, vector<8x32xf32> -> vector<8x32xf32>
    %78 = arith.addf %77, %13 : vector<8x32xf32>
    %79 = math.tanh %78 : vector<8x32xf32>
    %cst_21 = arith.constant dense<0.000000e+00> : vector<8x32xf32>
    %80 = tpu.matmul %79, %4, %cst_21 {dimension_numbers = #tpu.dot_dimension_numbers<[1], [0], [0], [1], [0, 0, 1, 1], [], []>} : vector<8x32xf32>, vector<32x32xf32>, vector<8x32xf32> -> vector<8x32xf32>
    %81 = arith.mulf %7, %80 : vector<8x32xf32>
    %82 = arith.addf %78, %81 : vector<8x32xf32>
    %83 = math.tanh %82 : vector<8x32xf32>
    %cst_22 = arith.constant dense<0.000000e+00> : vector<8x32xf32>
    %84 = tpu.matmul %83, %4, %cst_22 {dimension_numbers = #tpu.dot_dimension_numbers<[1], [0], [0], [1], [0, 0, 1, 1], [], []>} : vector<8x32xf32>, vector<32x32xf32>, vector<8x32xf32> -> vector<8x32xf32>
    %85 = arith.mulf %7, %84 : vector<8x32xf32>
    %86 = arith.addf %78, %85 : vector<8x32xf32>
    %87 = math.tanh %86 : vector<8x32xf32>
    %88 = arith.addf %83, %87 : vector<8x32xf32>
    %89 = arith.addf %88, %88 : vector<8x32xf32>
    %90 = arith.addf %79, %89 : vector<8x32xf32>
    %cst_23 = arith.constant dense<0.000000e+00> : vector<8x32xf32>
    %91 = tpu.matmul %87, %4, %cst_23 {dimension_numbers = #tpu.dot_dimension_numbers<[1], [0], [0], [1], [0, 0, 1, 1], [], []>} : vector<8x32xf32>, vector<32x32xf32>, vector<8x32xf32> -> vector<8x32xf32>
    %92 = arith.mulf %8, %91 : vector<8x32xf32>
    %93 = arith.addf %78, %92 : vector<8x32xf32>
    %94 = math.tanh %93 : vector<8x32xf32>
    %95 = arith.addf %90, %94 : vector<8x32xf32>
    %96 = arith.mulf %10, %95 : vector<8x32xf32>
    %97 = arith.addf %76, %96 : vector<8x32xf32>
    %c4_i32 = arith.constant 4 : i32
    %cst_24 = arith.constant dense<0.000000e+00> : vector<8x32xf32>
    %98 = tpu.matmul %97, %4, %cst_24 {dimension_numbers = #tpu.dot_dimension_numbers<[1], [0], [0], [1], [0, 0, 1, 1], [], []>} : vector<8x32xf32>, vector<32x32xf32>, vector<8x32xf32> -> vector<8x32xf32>
    %99 = arith.addf %98, %13 : vector<8x32xf32>
    %100 = math.tanh %99 : vector<8x32xf32>
    %cst_25 = arith.constant dense<0.000000e+00> : vector<8x32xf32>
    %101 = tpu.matmul %100, %4, %cst_25 {dimension_numbers = #tpu.dot_dimension_numbers<[1], [0], [0], [1], [0, 0, 1, 1], [], []>} : vector<8x32xf32>, vector<32x32xf32>, vector<8x32xf32> -> vector<8x32xf32>
    %102 = arith.mulf %7, %101 : vector<8x32xf32>
    %103 = arith.addf %99, %102 : vector<8x32xf32>
    %104 = math.tanh %103 : vector<8x32xf32>
    %cst_26 = arith.constant dense<0.000000e+00> : vector<8x32xf32>
    %105 = tpu.matmul %104, %4, %cst_26 {dimension_numbers = #tpu.dot_dimension_numbers<[1], [0], [0], [1], [0, 0, 1, 1], [], []>} : vector<8x32xf32>, vector<32x32xf32>, vector<8x32xf32> -> vector<8x32xf32>
    %106 = arith.mulf %7, %105 : vector<8x32xf32>
    %107 = arith.addf %99, %106 : vector<8x32xf32>
    %108 = math.tanh %107 : vector<8x32xf32>
    %109 = arith.addf %104, %108 : vector<8x32xf32>
    %110 = arith.addf %109, %109 : vector<8x32xf32>
    %111 = arith.addf %100, %110 : vector<8x32xf32>
    %cst_27 = arith.constant dense<0.000000e+00> : vector<8x32xf32>
    %112 = tpu.matmul %108, %4, %cst_27 {dimension_numbers = #tpu.dot_dimension_numbers<[1], [0], [0], [1], [0, 0, 1, 1], [], []>} : vector<8x32xf32>, vector<32x32xf32>, vector<8x32xf32> -> vector<8x32xf32>
    %113 = arith.mulf %8, %112 : vector<8x32xf32>
    %114 = arith.addf %99, %113 : vector<8x32xf32>
    %115 = math.tanh %114 : vector<8x32xf32>
    %116 = arith.addf %111, %115 : vector<8x32xf32>
    %117 = arith.mulf %10, %116 : vector<8x32xf32>
    %118 = arith.addf %97, %117 : vector<8x32xf32>
    %c5_i32 = arith.constant 5 : i32
    %cst_28 = arith.constant dense<0.000000e+00> : vector<8x32xf32>
    %119 = tpu.matmul %118, %4, %cst_28 {dimension_numbers = #tpu.dot_dimension_numbers<[1], [0], [0], [1], [0, 0, 1, 1], [], []>} : vector<8x32xf32>, vector<32x32xf32>, vector<8x32xf32> -> vector<8x32xf32>
    %120 = arith.addf %119, %13 : vector<8x32xf32>
    %121 = math.tanh %120 : vector<8x32xf32>
    %cst_29 = arith.constant dense<0.000000e+00> : vector<8x32xf32>
    %122 = tpu.matmul %121, %4, %cst_29 {dimension_numbers = #tpu.dot_dimension_numbers<[1], [0], [0], [1], [0, 0, 1, 1], [], []>} : vector<8x32xf32>, vector<32x32xf32>, vector<8x32xf32> -> vector<8x32xf32>
    %123 = arith.mulf %7, %122 : vector<8x32xf32>
    %124 = arith.addf %120, %123 : vector<8x32xf32>
    %125 = math.tanh %124 : vector<8x32xf32>
    %cst_30 = arith.constant dense<0.000000e+00> : vector<8x32xf32>
    %126 = tpu.matmul %125, %4, %cst_30 {dimension_numbers = #tpu.dot_dimension_numbers<[1], [0], [0], [1], [0, 0, 1, 1], [], []>} : vector<8x32xf32>, vector<32x32xf32>, vector<8x32xf32> -> vector<8x32xf32>
    %127 = arith.mulf %7, %126 : vector<8x32xf32>
    %128 = arith.addf %120, %127 : vector<8x32xf32>
    %129 = math.tanh %128 : vector<8x32xf32>
    %130 = arith.addf %125, %129 : vector<8x32xf32>
    %131 = arith.addf %130, %130 : vector<8x32xf32>
    %132 = arith.addf %121, %131 : vector<8x32xf32>
    %cst_31 = arith.constant dense<0.000000e+00> : vector<8x32xf32>
    %133 = tpu.matmul %129, %4, %cst_31 {dimension_numbers = #tpu.dot_dimension_numbers<[1], [0], [0], [1], [0, 0, 1, 1], [], []>} : vector<8x32xf32>, vector<32x32xf32>, vector<8x32xf32> -> vector<8x32xf32>
    %134 = arith.mulf %8, %133 : vector<8x32xf32>
    %135 = arith.addf %120, %134 : vector<8x32xf32>
    %136 = math.tanh %135 : vector<8x32xf32>
    %137 = arith.addf %132, %136 : vector<8x32xf32>
    %138 = arith.mulf %10, %137 : vector<8x32xf32>
    %139 = arith.addf %118, %138 : vector<8x32xf32>
    %c6_i32 = arith.constant 6 : i32
    %cst_32 = arith.constant dense<0.000000e+00> : vector<8x32xf32>
    %140 = tpu.matmul %139, %4, %cst_32 {dimension_numbers = #tpu.dot_dimension_numbers<[1], [0], [0], [1], [0, 0, 1, 1], [], []>} : vector<8x32xf32>, vector<32x32xf32>, vector<8x32xf32> -> vector<8x32xf32>
    %141 = arith.addf %140, %13 : vector<8x32xf32>
    %142 = math.tanh %141 : vector<8x32xf32>
    %cst_33 = arith.constant dense<0.000000e+00> : vector<8x32xf32>
    %143 = tpu.matmul %142, %4, %cst_33 {dimension_numbers = #tpu.dot_dimension_numbers<[1], [0], [0], [1], [0, 0, 1, 1], [], []>} : vector<8x32xf32>, vector<32x32xf32>, vector<8x32xf32> -> vector<8x32xf32>
    %144 = arith.mulf %7, %143 : vector<8x32xf32>
    %145 = arith.addf %141, %144 : vector<8x32xf32>
    %146 = math.tanh %145 : vector<8x32xf32>
    %cst_34 = arith.constant dense<0.000000e+00> : vector<8x32xf32>
    %147 = tpu.matmul %146, %4, %cst_34 {dimension_numbers = #tpu.dot_dimension_numbers<[1], [0], [0], [1], [0, 0, 1, 1], [], []>} : vector<8x32xf32>, vector<32x32xf32>, vector<8x32xf32> -> vector<8x32xf32>
    %148 = arith.mulf %7, %147 : vector<8x32xf32>
    %149 = arith.addf %141, %148 : vector<8x32xf32>
    %150 = math.tanh %149 : vector<8x32xf32>
    %151 = arith.addf %146, %150 : vector<8x32xf32>
    %152 = arith.addf %151, %151 : vector<8x32xf32>
    %153 = arith.addf %142, %152 : vector<8x32xf32>
    %cst_35 = arith.constant dense<0.000000e+00> : vector<8x32xf32>
    %154 = tpu.matmul %150, %4, %cst_35 {dimension_numbers = #tpu.dot_dimension_numbers<[1], [0], [0], [1], [0, 0, 1, 1], [], []>} : vector<8x32xf32>, vector<32x32xf32>, vector<8x32xf32> -> vector<8x32xf32>
    %155 = arith.mulf %8, %154 : vector<8x32xf32>
    %156 = arith.addf %141, %155 : vector<8x32xf32>
    %157 = math.tanh %156 : vector<8x32xf32>
    %158 = arith.addf %153, %157 : vector<8x32xf32>
    %159 = arith.mulf %10, %158 : vector<8x32xf32>
    %160 = arith.addf %139, %159 : vector<8x32xf32>
    %c7_i32 = arith.constant 7 : i32
    %cst_36 = arith.constant dense<0.000000e+00> : vector<8x32xf32>
    %161 = tpu.matmul %160, %4, %cst_36 {dimension_numbers = #tpu.dot_dimension_numbers<[1], [0], [0], [1], [0, 0, 1, 1], [], []>} : vector<8x32xf32>, vector<32x32xf32>, vector<8x32xf32> -> vector<8x32xf32>
    %162 = arith.addf %161, %13 : vector<8x32xf32>
    %163 = math.tanh %162 : vector<8x32xf32>
    %cst_37 = arith.constant dense<0.000000e+00> : vector<8x32xf32>
    %164 = tpu.matmul %163, %4, %cst_37 {dimension_numbers = #tpu.dot_dimension_numbers<[1], [0], [0], [1], [0, 0, 1, 1], [], []>} : vector<8x32xf32>, vector<32x32xf32>, vector<8x32xf32> -> vector<8x32xf32>
    %165 = arith.mulf %7, %164 : vector<8x32xf32>
    %166 = arith.addf %162, %165 : vector<8x32xf32>
    %167 = math.tanh %166 : vector<8x32xf32>
    %cst_38 = arith.constant dense<0.000000e+00> : vector<8x32xf32>
    %168 = tpu.matmul %167, %4, %cst_38 {dimension_numbers = #tpu.dot_dimension_numbers<[1], [0], [0], [1], [0, 0, 1, 1], [], []>} : vector<8x32xf32>, vector<32x32xf32>, vector<8x32xf32> -> vector<8x32xf32>
    %169 = arith.mulf %7, %168 : vector<8x32xf32>
    %170 = arith.addf %162, %169 : vector<8x32xf32>
    %171 = math.tanh %170 : vector<8x32xf32>
    %172 = arith.addf %167, %171 : vector<8x32xf32>
    %173 = arith.addf %172, %172 : vector<8x32xf32>
    %174 = arith.addf %163, %173 : vector<8x32xf32>
    %cst_39 = arith.constant dense<0.000000e+00> : vector<8x32xf32>
    %175 = tpu.matmul %171, %4, %cst_39 {dimension_numbers = #tpu.dot_dimension_numbers<[1], [0], [0], [1], [0, 0, 1, 1], [], []>} : vector<8x32xf32>, vector<32x32xf32>, vector<8x32xf32> -> vector<8x32xf32>
    %176 = arith.mulf %8, %175 : vector<8x32xf32>
    %177 = arith.addf %162, %176 : vector<8x32xf32>
    %178 = math.tanh %177 : vector<8x32xf32>
    %179 = arith.addf %174, %178 : vector<8x32xf32>
    %180 = arith.mulf %10, %179 : vector<8x32xf32>
    %181 = arith.addf %160, %180 : vector<8x32xf32>
    %c0_40 = arith.constant 0 : index
    %c0_41 = arith.constant 0 : index
    %182 = vector.load %arg4[%c0_40, %c0_41] : memref<8x32xf32, #tpu.memory_space<vmem>>, vector<8x32xf32>
    tpu.vector_store %arg4[%c0_40, %c0_41], %181 {strides = array<i32>} : memref<8x32xf32, #tpu.memory_space<vmem>>, vector<8x32xf32>,
    return
  }
}

</mosaic_0001>

<llo_original>
// kernel: tpu_custom_call.1
$region0: #{tpu_custom_call.1}
  #allocation0 [shape = 'u32[]', space=smem, size = 0x4, offset = 0x4, fixed_abs, tag = 'smem constant byte address 0x4 - core index']
  #allocation1 [shape = 'u32[144,128]{1,0:T(1,128)}', space=vmem, size = 0x12000, scoped, tag = 'internal scratch']
  %s0 = inlined_call_operand.hbm [shape: f32[2], index: 0, kind: input, shape index: {}]
  %s1 = inlined_call_operand.hbm [shape: f32[8,32], index: 1, kind: input, shape index: {}]
  %s2 = inlined_call_operand.hbm [shape: f32[32,32], index: 2, kind: input, shape index: {}]
  %s3 = inlined_call_operand.vmem [shape: f32[1,32], index: 3, kind: input, shape index: {}]
  %s4 = inlined_call_operand.hbm [shape: f32[8,32], index: 4, kind: output, shape index: {}]
  %s5 = sld [smem:[#allocation0]]
  $region38: #{tpu_custom_call.1} parent=0
    _
  %s7 = ssub.s32 1, %s5
  %s8 = scalar_select 0, %s7, %s5
  $region1: #{tpu_custom_call.1} parent=0
    #allocation2 [shape = 'u8[512]{0}', space=smem, size = 0x200, scoped, tag = 'input window, operand 0, single buffered']
    #allocation3 [shape = 's32[1]{0}', space=sflag, size = 0x4, scoped, tag = 'scoped memory for tpu_custom_call.1']
    #allocation4 [shape = 's32[1]{0}', space=sflag, size = 0x4, scoped, tag = 'scoped memory for tpu_custom_call.1']
    #allocation5 [shape = 's32[1]{0}', space=sflag, size = 0x4, scoped, tag = 'scoped memory for tpu_custom_call.1']
    #allocation6 [shape = 'u8[4096]{0}', space=vmem, size = 0x1000, scoped, tag = 'input window, operand 1, single buffered']
    #allocation7 [shape = 'u8[16384]{0}', space=vmem, size = 0x4000, scoped, tag = 'input window, operand 2, single buffered']
    #allocation8 [shape = 's32[1]{0}', space=sflag, size = 0x4, scoped, tag = 'scoped memory for tpu_custom_call.1']
    #allocation9 [shape = 'u8[4096]{0}', space=vmem, size = 0x1000, scoped, tag = 'output window, operand 0, single buffered']
    %9 = vsyncpa [#allocation5], 0
    %10 = vsyncpa [#allocation3], 0
    %11 = vsyncpa [#allocation8], 0
    %12 = vsyncpa [#allocation4], 0
    // Predicated region
    $region2: #{tpu_custom_call.1} parent=1 // pred_check
      _
    $region3: #{tpu_custom_call.1} parent=1 // pred_check_branch
      %14 = sbr.rel (0) target = $region5
    $region4: #{tpu_custom_call.1} parent=1 // pred_region
      %s16 = ssub.s32 16, 16
      %17 = vsyncadd [#allocation5], %s16
      %20 = dma.hbm_to_smem %s0, 16, [#allocation2], [#allocation5]
    $region5: #{tpu_custom_call.1} parent=1 // pred_fallthru
      _
    // Predicated region
    $region6: #{tpu_custom_call.1} parent=1 // pred_check
      _
    $region7: #{tpu_custom_call.1} parent=1 // pred_check_branch
      %22 = sbr.rel (0) target = $region9
    $region8: #{tpu_custom_call.1} parent=1 // pred_region
      %s24 = ssub.s32 128, 128
      %25 = vsyncadd [#allocation3], %s24
      %s27 = sshll.u32 [#allocation6], 4
      %s28 = int_to_ptr.vmem [resolvable:$true] %s27
      %30 = dma.hbm_to_vmem [thread:$0]  %s1, 128, %s28, [#allocation3]
    $region9: #{tpu_custom_call.1} parent=1 // pred_fallthru
      _
    // Predicated region
    $region10: #{tpu_custom_call.1} parent=1 // pred_check
      _
    $region11: #{tpu_custom_call.1} parent=1 // pred_check_branch
      %32 = sbr.rel (0) target = $region13
    $region12: #{tpu_custom_call.1} parent=1 // pred_region
      %s34 = ssub.s32 512, 512
      %35 = vsyncadd [#allocation8], %s34
      %s36 = sshll.u32 [#allocation7], 4
      %s37 = int_to_ptr.vmem [resolvable:$true] %s36
      %42 = dma.hbm_to_vmem [thread:$0]  %s2, 512, %s37, [#allocation8], 128, 128, 8
    $region13: #{tpu_custom_call.1} parent=1 // pred_fallthru
      _
    // Predicated region
    $region14: #{tpu_custom_call.1} parent=1 // pred_check
      _
    $region15: #{tpu_custom_call.1} parent=1 // pred_check_branch
      %44 = sbr.rel (0) target = $region17
    $region16: #{tpu_custom_call.1} parent=1 // pred_region
      _
    $region17: #{tpu_custom_call.1} parent=1 // pred_fallthru
      _
    // Predicated region
    $region18: #{tpu_custom_call.1} parent=1 // pred_check
      _
    $region19: #{tpu_custom_call.1} parent=1 // pred_check_branch
      %46 = sbr.rel (0) target = $region21
    $region20: #{tpu_custom_call.1} parent=1 // pred_region
      %47 = dma.done [#allocation5], 16
    $region21: #{tpu_custom_call.1} parent=1 // pred_fallthru
      _
    // Predicated region
    $region22: #{tpu_custom_call.1} parent=1 // pred_check
      _
    $region23: #{tpu_custom_call.1} parent=1 // pred_check_branch
      %49 = sbr.rel (0) target = $region25
    $region24: #{tpu_custom_call.1} parent=1 // pred_region
      %50 = dma.done [#allocation3], 128
    $region25: #{tpu_custom_call.1} parent=1 // pred_fallthru
      _
    // Predicated region
    $region26: #{tpu_custom_call.1} parent=1 // pred_check
      _
    $region27: #{tpu_custom_call.1} parent=1 // pred_check_branch
      %52 = sbr.rel (0) target = $region29
    $region28: #{tpu_custom_call.1} parent=1 // pred_region
      %53 = dma.done [#allocation8], 512
    $region29: #{tpu_custom_call.1} parent=1 // pred_fallthru
      _
    %54 = sfence
    %s55 = sld [smem:[#allocation2]]
    %s56 = sld [smem:[#allocation2 + $0x1]]
    %s57 = ssub.f32 %s56, %s55
    %s58 = smul.f32 %s57, 0.125
    %v59 = vld [vmem:[#allocation7] sm:$0xff]
    %v60 = vld [vmem:[#allocation7 + $0x8] sm:$0xff]
    %v61 = vld [vmem:[#allocation7 + $0x10] sm:$0xff]
    %v62 = vld [vmem:[#allocation7 + $0x18] sm:$0xff]
    %v63 = vld [vmem:[#allocation6] sm:$0xff]
    %s64 = smul.f32 %s58, 0.5
    %v65 = vstv %s64
    %v66 = vstv %s58
    %s67 = smul.f32 %s58, 0.16666667
    %v68 = vstv %s67
    %v69 = vld [vmem:[%s3] sm:$0x1]
    %v71 = vlaneseq
    %v72 = vshrl.u32 %v71, 7
    %v73 = vsub.s32 0, %v72
    %v74 = vrot.slane %v69, %v73
    %vm76 = vcmask 261120
    %v78 = vsel %vm76, %v63, 0
    %80 = vmatprep.subr.mxu0 0.0
    %81 = vmatpush1.msra.mxu0 %v59
    %82 = vmatprep.subr.mxu0 0.0
    %83 = vmatpush1.msra.mxu0 %v60
    %84 = vmatprep.subr.mxu0 0.0
    %85 = vmatpush1.msra.mxu0 %v61
    %86 = vmatprep.subr.mxu0 0.0
    %87 = vmatpush1.msra.mxu0 %v62
    %88 = vmatprep.subr.mxu0 0.0
    %89 = vmatpush1.msra.mxu0 0.0
    %90 = vmatprep.subr.mxu0 0.0
    %91 = vmatpush1.msra.mxu0 0.0
    %92 = vmatprep.subr.mxu0 0.0
    %93 = vmatpush1.msra.mxu0 0.0
    %94 = vmatprep.subr.mxu0 0.0
    %95 = vmatpush1.msra.mxu0 0.0
    %96 = vmatprep.subr.mxu0 0.0
    %97 = vmatpush1.msra.mxu0 0.0
    %98 = vmatprep.subr.mxu0 0.0
    %99 = vmatpush1.msra.mxu0 0.0
    %100 = vmatprep.subr.mxu0 0.0
    %101 = vmatpush1.msra.mxu0 0.0
    %102 = vmatprep.subr.mxu0 0.0
    %103 = vmatpush1.msra.mxu0 0.0
    %104 = vmatprep.subr.mxu0 0.0
    %105 = vmatpush1.msra.mxu0 0.0
    %106 = vmatprep.subr.mxu0 0.0
    %107 = vmatpush1.msra.mxu0 0.0
    %108 = vmatprep.subr.mxu0 0.0
    %109 = vmatpush1.msra.mxu0 0.0
    %110 = vmatprep.subr.mxu0 0.0
    %111 = vmatpush1.msra.mxu0 0.0
    %112 = vmatprep.subr.mxu0 0.0
    %113 = vmatpush1.msra.mxu0 0.0
    %114 = vmatprep.subr.mxu0 0.0
    %115 = vmatpush1.msra.mxu0 0.0
    %116 = vmatprep.subr.mxu0 0.0
    %117 = vmatpush1.msra.mxu0 0.0
    %118 = vmatprep.subr.mxu0 0.0
    %119 = vmatpush1.msra.mxu0 0.0
    %120 = vmatprep.subr.mxu0 0.0
    %121 = vmatpush1.msra.mxu0 0.0
    %122 = vmatprep.subr.mxu0 0.0
    %123 = vmatpush1.msra.mxu0 0.0
    %124 = vmatprep.subr.mxu0 0.0
    %125 = vmatpush1.msra.mxu0 0.0
    %126 = vmatprep.subr.mxu0 0.0
    %127 = vmatpush1.msra.mxu0 0.0
    %128 = vmatprep.subr.mxu0 0.0
    %129 = vmatpush1.msra.mxu0 0.0
    %130 = vmatprep.subr.mxu0 0.0
    %131 = vmatpush1.msra.mxu0 0.0
    %132 = vmatprep.subr.mxu0 0.0
    %133 = vmatpush1.msra.mxu0 0.0
    %134 = vmatprep.subr.mxu0 0.0
    %135 = vmatpush1.msra.mxu0 0.0
    %136 = vmatprep.subr.mxu0 0.0
    %137 = vmatpush1.msra.mxu0 0.0
    %138 = vmatprep.subr.mxu0 0.0
    %139 = vmatpush1.msra.mxu0 0.0
    %140 = vmatprep.subr.mxu0 0.0
    %141 = vmatpush1.msra.mxu0 0.0
    %142 = vmatprep.subr.mxu0 0.0
    %143 = vmatpush1.msra.mxu0 0.0
    %144 = vmatprep.mubr.f32.mxu0 0.0
    %145 = vmatmul.mubr.f32.gmra.mrb[0].mxu0 %v78
    %v146 = vpop.f32.mrb[0].mxu0
    %v147 = vadd.f32 %v74, %v146
    %v148 = vpop.f32.mrb[0].mxu0
    %149 = vdwg.mxu0
    %v150 = vtanh.pop %v147
    %v152 = vsel %vm76, %v150, 0
    %154 = vmatprep.subr.mxu0 0.0
    %155 = vmatpush1.msra.mxu0 %v59
    %156 = vmatprep.subr.mxu0 0.0
    %157 = vmatpush1.msra.mxu0 %v60
    %158 = vmatprep.subr.mxu0 0.0
    %159 = vmatpush1.msra.mxu0 %v61
    %160 = vmatprep.subr.mxu0 0.0
    %161 = vmatpush1.msra.mxu0 %v62
    %162 = vmatprep.subr.mxu0 0.0
    %163 = vmatpush1.msra.mxu0 0.0
    %164 = vmatprep.subr.mxu0 0.0
    %165 = vmatpush1.msra.mxu0 0.0
    %166 = vmatprep.subr.mxu0 0.0
    %167 = vmatpush1.msra.mxu0 0.0
    %168 = vmatprep.subr.mxu0 0.0
    %169 = vmatpush1.msra.mxu0 0.0
    %170 = vmatprep.subr.mxu0 0.0
    %171 = vmatpush1.msra.mxu0 0.0
    %172 = vmatprep.subr.mxu0 0.0
    %173 = vmatpush1.msra.mxu0 0.0
    %174 = vmatprep.subr.mxu0 0.0
    %175 = vmatpush1.msra.mxu0 0.0
    %176 = vmatprep.subr.mxu0 0.0
    %177 = vmatpush1.msra.mxu0 0.0
    %178 = vmatprep.subr.mxu0 0.0
    %179 = vmatpush1.msra.mxu0 0.0
    %180 = vmatprep.subr.mxu0 0.0
    %181 = vmatpush1.msra.mxu0 0.0
    %182 = vmatprep.subr.mxu0 0.0
    %183 = vmatpush1.msra.mxu0 0.0
    %184 = vmatprep.subr.mxu0 0.0
    %185 = vmatpush1.msra.mxu0 0.0
    %186 = vmatprep.subr.mxu0 0.0
    %187 = vmatpush1.msra.mxu0 0.0
    %188 = vmatprep.subr.mxu0 0.0
    %189 = vmatpush1.msra.mxu0 0.0
    %190 = vmatprep.subr.mxu0 0.0
    %191 = vmatpush1.msra.mxu0 0.0
    %192 = vmatprep.subr.mxu0 0.0
    %193 = vmatpush1.msra.mxu0 0.0
    %194 = vmatprep.subr.mxu0 0.0
    %195 = vmatpush1.msra.mxu0 0.0
    %196 = vmatprep.subr.mxu0 0.0
    %197 = vmatpush1.msra.mxu0 0.0
    %198 = vmatprep.subr.mxu0 0.0
    %199 = vmatpush1.msra.mxu0 0.0
    %200 = vmatprep.subr.mxu0 0.0
    %201 = vmatpush1.msra.mxu0 0.0
    %202 = vmatprep.subr.mxu0 0.0
    %203 = vmatpush1.msra.mxu0 0.0
    %204 = vmatprep.subr.mxu0 0.0
    %205 = vmatpush1.msra.mxu0 0.0
    %206 = vmatprep.subr.mxu0 0.0
    %207 = vmatpush1.msra.mxu0 0.0
    %208 = vmatprep.subr.mxu0 0.0
    %209 = vmatpush1.msra.mxu0 0.0
    %210 = vmatprep.subr.mxu0 0.0
    %211 = vmatpush1.msra.mxu0 0.0
    %212 = vmatprep.subr.mxu0 0.0
    %213 = vmatpush1.msra.mxu0 0.0
    %214 = vmatprep.subr.mxu0 0.0
    %215 = vmatpush1.msra.mxu0 0.0
    %216 = vmatprep.subr.mxu0 0.0
    %217 = vmatpush1.msra.mxu0 0.0
    %218 = vmatprep.mubr.f32.mxu0 0.0
    %219 = vmatmul.mubr.f32.gmra.mrb[0].mxu0 %v152
    %v220 = vpop.f32.mrb[0].mxu0
    %v221 = vadd.f32 0.0, %v220
    %v222 = vpop.f32.mrb[0].mxu0
    %223 = vdwg.mxu0
    %v224 = vmul.f32 %v65, %v221
    %v225 = vadd.f32 %v147, %v224
    %v226 = vtanh.pop %v225
    %v228 = vsel %vm76, %v226, 0
    %230 = vmatprep.subr.mxu0 0.0
    %231 = vmatpush1.msra.mxu0 %v59
    %232 = vmatprep.subr.mxu0 0.0
    %233 = vmatpush1.msra.mxu0 %v60
    %234 = vmatprep.subr.mxu0 0.0
    %235 = vmatpush1.msra.mxu0 %v61
    %236 = vmatprep.subr.mxu0 0.0
    %237 = vmatpush1.msra.mxu0 %v62
    %238 = vmatprep.subr.mxu0 0.0
    %239 = vmatpush1.msra.mxu0 0.0
    %240 = vmatprep.subr.mxu0 0.0
    %241 = vmatpush1.msra.mxu0 0.0
    %242 = vmatprep.subr.mxu0 0.0
    %243 = vmatpush1.msra.mxu0 0.0
    %244 = vmatprep.subr.mxu0 0.0
    %245 = vmatpush1.msra.mxu0 0.0
    %246 = vmatprep.subr.mxu0 0.0
    %247 = vmatpush1.msra.mxu0 0.0
    %248 = vmatprep.subr.mxu0 0.0
    %249 = vmatpush1.msra.mxu0 0.0
    %250 = vmatprep.subr.mxu0 0.0
    %251 = vmatpush1.msra.mxu0 0.0
    %252 = vmatprep.subr.mxu0 0.0
    %253 = vmatpush1.msra.mxu0 0.0
    %254 = vmatprep.subr.mxu0 0.0
    %255 = vmatpush1.msra.mxu0 0.0
    %256 = vmatprep.subr.mxu0 0.0
    %257 = vmatpush1.msra.mxu0 0.0
    %258 = vmatprep.subr.mxu0 0.0
    %259 = vmatpush1.msra.mxu0 0.0
    %260 = vmatprep.subr.mxu0 0.0
    %261 = vmatpush1.msra.mxu0 0.0
    %262 = vmatprep.subr.mxu0 0.0
    %263 = vmatpush1.msra.mxu0 0.0
    %264 = vmatprep.subr.mxu0 0.0
    %265 = vmatpush1.msra.mxu0 0.0
    %266 = vmatprep.subr.mxu0 0.0
    %267 = vmatpush1.msra.mxu0 0.0
    %268 = vmatprep.subr.mxu0 0.0
    %269 = vmatpush1.msra.mxu0 0.0
    %270 = vmatprep.subr.mxu0 0.0
    %271 = vmatpush1.msra.mxu0 0.0
    %272 = vmatprep.subr.mxu0 0.0
    %273 = vmatpush1.msra.mxu0 0.0
    %274 = vmatprep.subr.mxu0 0.0
    %275 = vmatpush1.msra.mxu0 0.0
    %276 = vmatprep.subr.mxu0 0.0
    %277 = vmatpush1.msra.mxu0 0.0
    %278 = vmatprep.subr.mxu0 0.0
    %279 = vmatpush1.msra.mxu0 0.0
    %280 = vmatprep.subr.mxu0 0.0
    %281 = vmatpush1.msra.mxu0 0.0
    %282 = vmatprep.subr.mxu0 0.0
    %283 = vmatpush1.msra.mxu0 0.0
    %284 = vmatprep.subr.mxu0 0.0
    %285 = vmatpush1.msra.mxu0 0.0
    %286 = vmatprep.subr.mxu0 0.0
    %287 = vmatpush1.msra.mxu0 0.0
    %288 = vmatprep.subr.mxu0 0.0
    %289 = vmatpush1.msra.mxu0 0.0
    %290 = vmatprep.subr.mxu0 0.0
    %291 = vmatpush1.msra.mxu0 0.0
    %292 = vmatprep.subr.mxu0 0.0
    %293 = vmatpush1.msra.mxu0 0.0
    %294 = vmatprep.mubr.f32.mxu0 0.0
    %295 = vmatmul.mubr.f32.gmra.mrb[0].mxu0 %v228
    %v296 = vpop.f32.mrb[0].mxu0
    %v297 = vadd.f32 0.0, %v296
    %v298 = vpop.f32.mrb[0].mxu0
    %299 = vdwg.mxu0
    %v300 = vmul.f32 %v65, %v297
    %v301 = vadd.f32 %v147, %v300
    %v302 = vtanh.pop %v301
    %v303 = vadd.f32 %v226, %v302
    %v304 = vadd.f32 %v303, %v303
    %v305 = vadd.f32 %v150, %v304
    %v307 = vsel %vm76, %v302, 0
    %309 = vmatprep.subr.mxu0 0.0
    %310 = vmatpush1.msra.mxu0 %v59
    %311 = vmatprep.subr.mxu0 0.0
    %312 = vmatpush1.msra.mxu0 %v60
    %313 = vmatprep.subr.mxu0 0.0
    %314 = vmatpush1.msra.mxu0 %v61
    %315 = vmatprep.subr.mxu0 0.0
    %316 = vmatpush1.msra.mxu0 %v62
    %317 = vmatprep.subr.mxu0 0.0
    %318 = vmatpush1.msra.mxu0 0.0
    %319 = vmatprep.subr.mxu0 0.0
    %320 = vmatpush1.msra.mxu0 0.0
    %321 = vmatprep.subr.mxu0 0.0
    %322 = vmatpush1.msra.mxu0 0.0
    %323 = vmatprep.subr.mxu0 0.0
    %324 = vmatpush1.msra.mxu0 0.0
    %325 = vmatprep.subr.mxu0 0.0
    %326 = vmatpush1.msra.mxu0 0.0
    %327 = vmatprep.subr.mxu0 0.0
    %328 = vmatpush1.msra.mxu0 0.0
    %329 = vmatprep.subr.mxu0 0.0
    %330 = vmatpush1.msra.mxu0 0.0
    %331 = vmatprep.subr.mxu0 0.0
    %332 = vmatpush1.msra.mxu0 0.0
    %333 = vmatprep.subr.mxu0 0.0
    %334 = vmatpush1.msra.mxu0 0.0
    %335 = vmatprep.subr.mxu0 0.0
    %336 = vmatpush1.msra.mxu0 0.0
    %337 = vmatprep.subr.mxu0 0.0
    %338 = vmatpush1.msra.mxu0 0.0
    %339 = vmatprep.subr.mxu0 0.0
    %340 = vmatpush1.msra.mxu0 0.0
    %341 = vmatprep.subr.mxu0 0.0
    %342 = vmatpush1.msra.mxu0 0.0
    %343 = vmatprep.subr.mxu0 0.0
    %344 = vmatpush1.msra.mxu0 0.0
    %345 = vmatprep.subr.mxu0 0.0
    %346 = vmatpush1.msra.mxu0 0.0
    %347 = vmatprep.subr.mxu0 0.0
    %348 = vmatpush1.msra.mxu0 0.0
    %349 = vmatprep.subr.mxu0 0.0
    %350 = vmatpush1.msra.mxu0 0.0
    %351 = vmatprep.subr.mxu0 0.0
    %352 = vmatpush1.msra.mxu0 0.0
    %353 = vmatprep.subr.mxu0 0.0
    %354 = vmatpush1.msra.mxu0 0.0
    %355 = vmatprep.subr.mxu0 0.0
    %356 = vmatpush1.msra.mxu0 0.0
    %357 = vmatprep.subr.mxu0 0.0
    %358 = vmatpush1.msra.mxu0 0.0
    %359 = vmatprep.subr.mxu0 0.0
    %360 = vmatpush1.msra.mxu0 0.0
    %361 = vmatprep.subr.mxu0 0.0
    %362 = vmatpush1.msra.mxu0 0.0
    %363 = vmatprep.subr.mxu0 0.0
    %364 = vmatpush1.msra.mxu0 0.0
    %365 = vmatprep.subr.mxu0 0.0
    %366 = vmatpush1.msra.mxu0 0.0
    %367 = vmatprep.subr.mxu0 0.0
    %368 = vmatpush1.msra.mxu0 0.0
    %369 = vmatprep.subr.mxu0 0.0
    %370 = vmatpush1.msra.mxu0 0.0
    %371 = vmatprep.subr.mxu0 0.0
    %372 = vmatpush1.msra.mxu0 0.0
    %373 = vmatprep.mubr.f32.mxu0 0.0
    %374 = vmatmul.mubr.f32.gmra.mrb[0].mxu0 %v307
    %v375 = vpop.f32.mrb[0].mxu0
    %v376 = vadd.f32 0.0, %v375
    %v377 = vpop.f32.mrb[0].mxu0
    %378 = vdwg.mxu0
    %v379 = vmul.f32 %v66, %v376
    %v380 = vadd.f32 %v147, %v379
    %v381 = vtanh.pop %v380
    %v382 = vadd.f32 %v305, %v381
    %v383 = vmul.f32 %v68, %v382
    %v384 = vadd.f32 %v63, %v383
    %v386 = vsel %vm76, %v384, 0
    %388 = vmatprep.subr.mxu0 0.0
    %389 = vmatpush1.msra.mxu0 %v59
    %390 = vmatprep.subr.mxu0 0.0
    %391 = vmatpush1.msra.mxu0 %v60
    %392 = vmatprep.subr.mxu0 0.0
    %393 = vmatpush1.msra.mxu0 %v61
    %394 = vmatprep.subr.mxu0 0.0
    %395 = vmatpush1.msra.mxu0 %v62
    %396 = vmatprep.subr.mxu0 0.0
    %397 = vmatpush1.msra.mxu0 0.0
    %398 = vmatprep.subr.mxu0 0.0
    %399 = vmatpush1.msra.mxu0 0.0
    %400 = vmatprep.subr.mxu0 0.0
    %401 = vmatpush1.msra.mxu0 0.0
    %402 = vmatprep.subr.mxu0 0.0
    %403 = vmatpush1.msra.mxu0 0.0
    %404 = vmatprep.subr.mxu0 0.0
    %405 = vmatpush1.msra.mxu0 0.0
    %406 = vmatprep.subr.mxu0 0.0
    %407 = vmatpush1.msra.mxu0 0.0
    %408 = vmatprep.subr.mxu0 0.0
    %409 = vmatpush1.msra.mxu0 0.0
    %410 = vmatprep.subr.mxu0 0.0
    %411 = vmatpush1.msra.mxu0 0.0
    %412 = vmatprep.subr.mxu0 0.0
    %413 = vmatpush1.msra.mxu0 0.0
    %414 = vmatprep.subr.mxu0 0.0
    %415 = vmatpush1.msra.mxu0 0.0
    %416 = vmatprep.subr.mxu0 0.0
    %417 = vmatpush1.msra.mxu0 0.0
    %418 = vmatprep.subr.mxu0 0.0
    %419 = vmatpush1.msra.mxu0 0.0
    %420 = vmatprep.subr.mxu0 0.0
    %421 = vmatpush1.msra.mxu0 0.0
    %422 = vmatprep.subr.mxu0 0.0
    %423 = vmatpush1.msra.mxu0 0.0
    %424 = vmatprep.subr.mxu0 0.0
    %425 = vmatpush1.msra.mxu0 0.0
    %426 = vmatprep.subr.mxu0 0.0
    %427 = vmatpush1.msra.mxu0 0.0
    %428 = vmatprep.subr.mxu0 0.0
    %429 = vmatpush1.msra.mxu0 0.0
    %430 = vmatprep.subr.mxu0 0.0
    %431 = vmatpush1.msra.mxu0 0.0
    %432 = vmatprep.subr.mxu0 0.0
    %433 = vmatpush1.msra.mxu0 0.0
    %434 = vmatprep.subr.mxu0 0.0
    %435 = vmatpush1.msra.mxu0 0.0
    %436 = vmatprep.subr.mxu0 0.0
    %437 = vmatpush1.msra.mxu0 0.0
    %438 = vmatprep.subr.mxu0 0.0
    %439 = vmatpush1.msra.mxu0 0.0
    %440 = vmatprep.subr.mxu0 0.0
    %441 = vmatpush1.msra.mxu0 0.0
    %442 = vmatprep.subr.mxu0 0.0
    %443 = vmatpush1.msra.mxu0 0.0
    %444 = vmatprep.subr.mxu0 0.0
    %445 = vmatpush1.msra.mxu0 0.0
    %446 = vmatprep.subr.mxu0 0.0
    %447 = vmatpush1.msra.mxu0 0.0
    %448 = vmatprep.subr.mxu0 0.0
    %449 = vmatpush1.msra.mxu0 0.0
    %450 = vmatprep.subr.mxu0 0.0
    %451 = vmatpush1.msra.mxu0 0.0
    %452 = vmatprep.mubr.f32.mxu0 0.0
    %453 = vmatmul.mubr.f32.gmra.mrb[0].mxu0 %v386
    %v454 = vpop.f32.mrb[0].mxu0
    %v455 = vadd.f32 %v74, %v454
    %v456 = vpop.f32.mrb[0].mxu0
    %457 = vdwg.mxu0
    %v458 = vtanh.pop %v455
    %v460 = vsel %vm76, %v458, 0
    %462 = vmatprep.subr.mxu0 0.0
    %463 = vmatpush1.msra.mxu0 %v59
    %464 = vmatprep.subr.mxu0 0.0
    %465 = vmatpush1.msra.mxu0 %v60
    %466 = vmatprep.subr.mxu0 0.0
    %467 = vmatpush1.msra.mxu0 %v61
    %468 = vmatprep.subr.mxu0 0.0
    %469 = vmatpush1.msra.mxu0 %v62
    %470 = vmatprep.subr.mxu0 0.0
    %471 = vmatpush1.msra.mxu0 0.0
    %472 = vmatprep.subr.mxu0 0.0
    %473 = vmatpush1.msra.mxu0 0.0
    %474 = vmatprep.subr.mxu0 0.0
    %475 = vmatpush1.msra.mxu0 0.0
    %476 = vmatprep.subr.mxu0 0.0
    %477 = vmatpush1.msra.mxu0 0.0
    %478 = vmatprep.subr.mxu0 0.0
    %479 = vmatpush1.msra.mxu0 0.0
    %480 = vmatprep.subr.mxu0 0.0
    %481 = vmatpush1.msra.mxu0 0.0
    %482 = vmatprep.subr.mxu0 0.0
    %483 = vmatpush1.msra.mxu0 0.0
    %484 = vmatprep.subr.mxu0 0.0
    %485 = vmatpush1.msra.mxu0 0.0
    %486 = vmatprep.subr.mxu0 0.0
    %487 = vmatpush1.msra.mxu0 0.0
    %488 = vmatprep.subr.mxu0 0.0
    %489 = vmatpush1.msra.mxu0 0.0
    %490 = vmatprep.subr.mxu0 0.0
    %491 = vmatpush1.msra.mxu0 0.0
    %492 = vmatprep.subr.mxu0 0.0
    %493 = vmatpush1.msra.mxu0 0.0
    %494 = vmatprep.subr.mxu0 0.0
    %495 = vmatpush1.msra.mxu0 0.0
    %496 = vmatprep.subr.mxu0 0.0
    %497 = vmatpush1.msra.mxu0 0.0
    %498 = vmatprep.subr.mxu0 0.0
    %499 = vmatpush1.msra.mxu0 0.0
    %500 = vmatprep.subr.mxu0 0.0
    %501 = vmatpush1.msra.mxu0 0.0
    %502 = vmatprep.subr.mxu0 0.0
    %503 = vmatpush1.msra.mxu0 0.0
    %504 = vmatprep.subr.mxu0 0.0
    %505 = vmatpush1.msra.mxu0 0.0
    %506 = vmatprep.subr.mxu0 0.0
    %507 = vmatpush1.msra.mxu0 0.0
    %508 = vmatprep.subr.mxu0 0.0
    %509 = vmatpush1.msra.mxu0 0.0
    %510 = vmatprep.subr.mxu0 0.0
    %511 = vmatpush1.msra.mxu0 0.0
    %512 = vmatprep.subr.mxu0 0.0
    %513 = vmatpush1.msra.mxu0 0.0
    %514 = vmatprep.subr.mxu0 0.0
    %515 = vmatpush1.msra.mxu0 0.0
    %516 = vmatprep.subr.mxu0 0.0
    %517 = vmatpush1.msra.mxu0 0.0
    %518 = vmatprep.subr.mxu0 0.0
    %519 = vmatpush1.msra.mxu0 0.0
    %520 = vmatprep.subr.mxu0 0.0
    %521 = vmatpush1.msra.mxu0 0.0
    %522 = vmatprep.subr.mxu0 0.0
    %523 = vmatpush1.msra.mxu0 0.0
    %524 = vmatprep.subr.mxu0 0.0
    %525 = vmatpush1.msra.mxu0 0.0
    %526 = vmatprep.mubr.f32.mxu0 0.0
    %527 = vmatmul.mubr.f32.gmra.mrb[0].mxu0 %v460
    %v528 = vpop.f32.mrb[0].mxu0
    %v529 = vadd.f32 0.0, %v528
    %v530 = vpop.f32.mrb[0].mxu0
    %531 = vdwg.mxu0
    %v532 = vmul.f32 %v65, %v529
    %v533 = vadd.f32 %v455, %v532
    %v534 = vtanh.pop %v533
    %v536 = vsel %vm76, %v534, 0
    %538 = vmatprep.subr.mxu0 0.0
    %539 = vmatpush1.msra.mxu0 %v59
    %540 = vmatprep.subr.mxu0 0.0
    %541 = vmatpush1.msra.mxu0 %v60
    %542 = vmatprep.subr.mxu0 0.0
    %543 = vmatpush1.msra.mxu0 %v61
    %544 = vmatprep.subr.mxu0 0.0
    %545 = vmatpush1.msra.mxu0 %v62
    %546 = vmatprep.subr.mxu0 0.0
    %547 = vmatpush1.msra.mxu0 0.0
    %548 = vmatprep.subr.mxu0 0.0
    %549 = vmatpush1.msra.mxu0 0.0
    %550 = vmatprep.subr.mxu0 0.0
    %551 = vmatpush1.msra.mxu0 0.0
    %552 = vmatprep.subr.mxu0 0.0
    %553 = vmatpush1.msra.mxu0 0.0
    %554 = vmatprep.subr.mxu0 0.0
    %555 = vmatpush1.msra.mxu0 0.0
    %556 = vmatprep.subr.mxu0 0.0
    %557 = vmatpush1.msra.mxu0 0.0
    %558 = vmatprep.subr.mxu0 0.0
    %559 = vmatpush1.msra.mxu0 0.0
    %560 = vmatprep.subr.mxu0 0.0
    %561 = vmatpush1.msra.mxu0 0.0
    %562 = vmatprep.subr.mxu0 0.0
    %563 = vmatpush1.msra.mxu0 0.0
    %564 = vmatprep.subr.mxu0 0.0
    %565 = vmatpush1.msra.mxu0 0.0
    %566 = vmatprep.subr.mxu0 0.0
    %567 = vmatpush1.msra.mxu0 0.0
    %568 = vmatprep.subr.mxu0 0.0
    %569 = vmatpush1.msra.mxu0 0.0
    %570 = vmatprep.subr.mxu0 0.0
    %571 = vmatpush1.msra.mxu0 0.0
    %572 = vmatprep.subr.mxu0 0.0
    %573 = vmatpush1.msra.mxu0 0.0
    %574 = vmatprep.subr.mxu0 0.0
    %575 = vmatpush1.msra.mxu0 0.0
    %576 = vmatprep.subr.mxu0 0.0
    %577 = vmatpush1.msra.mxu0 0.0
    %578 = vmatprep.subr.mxu0 0.0
    %579 = vmatpush1.msra.mxu0 0.0
    %580 = vmatprep.subr.mxu0 0.0
    %581 = vmatpush1.msra.mxu0 0.0
    %582 = vmatprep.subr.mxu0 0.0
    %583 = vmatpush1.msra.mxu0 0.0
    %584 = vmatprep.subr.mxu0 0.0
    %585 = vmatpush1.msra.mxu0 0.0
    %586 = vmatprep.subr.mxu0 0.0
    %587 = vmatpush1.msra.mxu0 0.0
    %588 = vmatprep.subr.mxu0 0.0
    %589 = vmatpush1.msra.mxu0 0.0
    %590 = vmatprep.subr.mxu0 0.0
    %591 = vmatpush1.msra.mxu0 0.0
    %592 = vmatprep.subr.mxu0 0.0
    %593 = vmatpush1.msra.mxu0 0.0
    %594 = vmatprep.subr.mxu0 0.0
    %595 = vmatpush1.msra.mxu0 0.0
    %596 = vmatprep.subr.mxu0 0.0
    %597 = vmatpush1.msra.mxu0 0.0
    %598 = vmatprep.subr.mxu0 0.0
    %599 = vmatpush1.msra.mxu0 0.0
    %600 = vmatprep.subr.mxu0 0.0
    %601 = vmatpush1.msra.mxu0 0.0
    %602 = vmatprep.mubr.f32.mxu0 0.0
    %603 = vmatmul.mubr.f32.gmra.mrb[0].mxu0 %v536
    %v604 = vpop.f32.mrb[0].mxu0
    %v605 = vadd.f32 0.0, %v604
    %v606 = vpop.f32.mrb[0].mxu0
    %607 = vdwg.mxu0
    %v608 = vmul.f32 %v65, %v605
    %v609 = vadd.f32 %v455, %v608
    %v610 = vtanh.pop %v609
    %v611 = vadd.f32 %v534, %v610
    %v612 = vadd.f32 %v611, %v611
    %v613 = vadd.f32 %v458, %v612
    %v615 = vsel %vm76, %v610, 0
    %617 = vmatprep.subr.mxu0 0.0
    %618 = vmatpush1.msra.mxu0 %v59
    %619 = vmatprep.subr.mxu0 0.0
    %620 = vmatpush1.msra.mxu0 %v60
    %621 = vmatprep.subr.mxu0 0.0
    %622 = vmatpush1.msra.mxu0 %v61
    %623 = vmatprep.subr.mxu0 0.0
    %624 = vmatpush1.msra.mxu0 %v62
    %625 = vmatprep.subr.mxu0 0.0
    %626 = vmatpush1.msra.mxu0 0.0
    %627 = vmatprep.subr.mxu0 0.0
    %628 = vmatpush1.msra.mxu0 0.0
    %629 = vmatprep.subr.mxu0 0.0
    %630 = vmatpush1.msra.mxu0 0.0
    %631 = vmatprep.subr.mxu0 0.0
    %632 = vmatpush1.msra.mxu0 0.0
    %633 = vmatprep.subr.mxu0 0.0
    %634 = vmatpush1.msra.mxu0 0.0
    %635 = vmatprep.subr.mxu0 0.0
    %636 = vmatpush1.msra.mxu0 0.0
    %637 = vmatprep.subr.mxu0 0.0
    %638 = vmatpush1.msra.mxu0 0.0
    %639 = vmatprep.subr.mxu0 0.0
    %640 = vmatpush1.msra.mxu0 0.0
    %641 = vmatprep.subr.mxu0 0.0
    %642 = vmatpush1.msra.mxu0 0.0
    %643 = vmatprep.subr.mxu0 0.0
    %644 = vmatpush1.msra.mxu0 0.0
    %645 = vmatprep.subr.mxu0 0.0
    %646 = vmatpush1.msra.mxu0 0.0
    %647 = vmatprep.subr.mxu0 0.0
    %648 = vmatpush1.msra.mxu0 0.0
    %649 = vmatprep.subr.mxu0 0.0
    %650 = vmatpush1.msra.mxu0 0.0
    %651 = vmatprep.subr.mxu0 0.0
    %652 = vmatpush1.msra.mxu0 0.0
    %653 = vmatprep.subr.mxu0 0.0
    %654 = vmatpush1.msra.mxu0 0.0
    %655 = vmatprep.subr.mxu0 0.0
    %656 = vmatpush1.msra.mxu0 0.0
    %657 = vmatprep.subr.mxu0 0.0
    %658 = vmatpush1.msra.mxu0 0.0
    %659 = vmatprep.subr.mxu0 0.0
    %660 = vmatpush1.msra.mxu0 0.0
    %661 = vmatprep.subr.mxu0 0.0
    %662 = vmatpush1.msra.mxu0 0.0
    %663 = vmatprep.subr.mxu0 0.0
    %664 = vmatpush1.msra.mxu0 0.0
    %665 = vmatprep.subr.mxu0 0.0
    %666 = vmatpush1.msra.mxu0 0.0
    %667 = vmatprep.subr.mxu0 0.0
    %668 = vmatpush1.msra.mxu0 0.0
    %669 = vmatprep.subr.mxu0 0.0
    %670 = vmatpush1.msra.mxu0 0.0
    %671 = vmatprep.subr.mxu0 0.0
    %672 = vmatpush1.msra.mxu0 0.0
    %673 = vmatprep.subr.mxu0 0.0
    %674 = vmatpush1.msra.mxu0 0.0
    %675 = vmatprep.subr.mxu0 0.0
    %676 = vmatpush1.msra.mxu0 0.0
    %677 = vmatprep.subr.mxu0 0.0
    %678 = vmatpush1.msra.mxu0 0.0
    %679 = vmatprep.subr.mxu0 0.0
    %680 = vmatpush1.msra.mxu0 0.0
    %681 = vmatprep.mubr.f32.mxu0 0.0
    %682 = vmatmul.mubr.f32.gmra.mrb[0].mxu0 %v615
    %v683 = vpop.f32.mrb[0].mxu0
    %v684 = vadd.f32 0.0, %v683
    %v685 = vpop.f32.mrb[0].mxu0
    %686 = vdwg.mxu0
    %v687 = vmul.f32 %v66, %v684
    %v688 = vadd.f32 %v455, %v687
    %v689 = vtanh.pop %v688
    %v690 = vadd.f32 %v613, %v689
    %v691 = vmul.f32 %v68, %v690
    %v692 = vadd.f32 %v384, %v691
    %v694 = vsel %vm76, %v692, 0
    %696 = vmatprep.subr.mxu0 0.0
    %697 = vmatpush1.msra.mxu0 %v59
    %698 = vmatprep.subr.mxu0 0.0
    %699 = vmatpush1.msra.mxu0 %v60
    %700 = vmatprep.subr.mxu0 0.0
    %701 = vmatpush1.msra.mxu0 %v61
    %702 = vmatprep.subr.mxu0 0.0
    %703 = vmatpush1.msra.mxu0 %v62
    %704 = vmatprep.subr.mxu0 0.0
    %705 = vmatpush1.msra.mxu0 0.0
    %706 = vmatprep.subr.mxu0 0.0
    %707 = vmatpush1.msra.mxu0 0.0
    %708 = vmatprep.subr.mxu0 0.0
    %709 = vmatpush1.msra.mxu0 0.0
    %710 = vmatprep.subr.mxu0 0.0
    %711 = vmatpush1.msra.mxu0 0.0
    %712 = vmatprep.subr.mxu0 0.0
    %713 = vmatpush1.msra.mxu0 0.0
    %714 = vmatprep.subr.mxu0 0.0
    %715 = vmatpush1.msra.mxu0 0.0
    %716 = vmatprep.subr.mxu0 0.0
    %717 = vmatpush1.msra.mxu0 0.0
    %718 = vmatprep.subr.mxu0 0.0
    %719 = vmatpush1.msra.mxu0 0.0
    %720 = vmatprep.subr.mxu0 0.0
    %721 = vmatpush1.msra.mxu0 0.0
    %722 = vmatprep.subr.mxu0 0.0
    %723 = vmatpush1.msra.mxu0 0.0
    %724 = vmatprep.subr.mxu0 0.0
    %725 = vmatpush1.msra.mxu0 0.0
    %726 = vmatprep.subr.mxu0 0.0
    %727 = vmatpush1.msra.mxu0 0.0
    %728 = vmatprep.subr.mxu0 0.0
    %729 = vmatpush1.msra.mxu0 0.0
    %730 = vmatprep.subr.mxu0 0.0
    %731 = vmatpush1.msra.mxu0 0.0
    %732 = vmatprep.subr.mxu0 0.0
    %733 = vmatpush1.msra.mxu0 0.0
    %734 = vmatprep.subr.mxu0 0.0
    %735 = vmatpush1.msra.mxu0 0.0
    %736 = vmatprep.subr.mxu0 0.0
    %737 = vmatpush1.msra.mxu0 0.0
    %738 = vmatprep.subr.mxu0 0.0
    %739 = vmatpush1.msra.mxu0 0.0
    %740 = vmatprep.subr.mxu0 0.0
    %741 = vmatpush1.msra.mxu0 0.0
    %742 = vmatprep.subr.mxu0 0.0
    %743 = vmatpush1.msra.mxu0 0.0
    %744 = vmatprep.subr.mxu0 0.0
    %745 = vmatpush1.msra.mxu0 0.0
    %746 = vmatprep.subr.mxu0 0.0
    %747 = vmatpush1.msra.mxu0 0.0
    %748 = vmatprep.subr.mxu0 0.0
    %749 = vmatpush1.msra.mxu0 0.0
    %750 = vmatprep.subr.mxu0 0.0
    %751 = vmatpush1.msra.mxu0 0.0
    %752 = vmatprep.subr.mxu0 0.0
    %753 = vmatpush1.msra.mxu0 0.0
    %754 = vmatprep.subr.mxu0 0.0
    %755 = vmatpush1.msra.mxu0 0.0
    %756 = vmatprep.subr.mxu0 0.0
    %757 = vmatpush1.msra.mxu0 0.0
    %758 = vmatprep.subr.mxu0 0.0
    %759 = vmatpush1.msra.mxu0 0.0
    %760 = vmatprep.mubr.f32.mxu0 0.0
    %761 = vmatmul.mubr.f32.gmra.mrb[0].mxu0 %v694
    %v762 = vpop.f32.mrb[0].mxu0
    %v763 = vadd.f32 %v74, %v762
    %v764 = vpop.f32.mrb[0].mxu0
    %765 = vdwg.mxu0
    %v766 = vtanh.pop %v763
    %v768 = vsel %vm76, %v766, 0
    %770 = vmatprep.subr.mxu0 0.0
    %771 = vmatpush1.msra.mxu0 %v59
    %772 = vmatprep.subr.mxu0 0.0
    %773 = vmatpush1.msra.mxu0 %v60
    %774 = vmatprep.subr.mxu0 0.0
    %775 = vmatpush1.msra.mxu0 %v61
    %776 = vmatprep.subr.mxu0 0.0
    %777 = vmatpush1.msra.mxu0 %v62
    %778 = vmatprep.subr.mxu0 0.0
    %779 = vmatpush1.msra.mxu0 0.0
    %780 = vmatprep.subr.mxu0 0.0
    %781 = vmatpush1.msra.mxu0 0.0
    %782 = vmatprep.subr.mxu0 0.0
    %783 = vmatpush1.msra.mxu0 0.0
    %784 = vmatprep.subr.mxu0 0.0
    %785 = vmatpush1.msra.mxu0 0.0
    %786 = vmatprep.subr.mxu0 0.0
    %787 = vmatpush1.msra.mxu0 0.0
    %788 = vmatprep.subr.mxu0 0.0
    %789 = vmatpush1.msra.mxu0 0.0
    %790 = vmatprep.subr.mxu0 0.0
    %791 = vmatpush1.msra.mxu0 0.0
    %792 = vmatprep.subr.mxu0 0.0
    %793 = vmatpush1.msra.mxu0 0.0
    %794 = vmatprep.subr.mxu0 0.0
    %795 = vmatpush1.msra.mxu0 0.0
    %796 = vmatprep.subr.mxu0 0.0
    %797 = vmatpush1.msra.mxu0 0.0
    %798 = vmatprep.subr.mxu0 0.0
    %799 = vmatpush1.msra.mxu0 0.0
    %800 = vmatprep.subr.mxu0 0.0
    %801 = vmatpush1.msra.mxu0 0.0
    %802 = vmatprep.subr.mxu0 0.0
    %803 = vmatpush1.msra.mxu0 0.0
    %804 = vmatprep.subr.mxu0 0.0
    %805 = vmatpush1.msra.mxu0 0.0
    %806 = vmatprep.subr.mxu0 0.0
    %807 = vmatpush1.msra.mxu0 0.0
    %808 = vmatprep.subr.mxu0 0.0
    %809 = vmatpush1.msra.mxu0 0.0
    %810 = vmatprep.subr.mxu0 0.0
    %811 = vmatpush1.msra.mxu0 0.0
    %812 = vmatprep.subr.mxu0 0.0
    %813 = vmatpush1.msra.mxu0 0.0
    %814 = vmatprep.subr.mxu0 0.0
    %815 = vmatpush1.msra.mxu0 0.0
    %816 = vmatprep.subr.mxu0 0.0
    %817 = vmatpush1.msra.mxu0 0.0
    %818 = vmatprep.subr.mxu0 0.0
    %819 = vmatpush1.msra.mxu0 0.0
    %820 = vmatprep.subr.mxu0 0.0
    %821 = vmatpush1.msra.mxu0 0.0
    %822 = vmatprep.subr.mxu0 0.0
    %823 = vmatpush1.msra.mxu0 0.0
    %824 = vmatprep.subr.mxu0 0.0
    %825 = vmatpush1.msra.mxu0 0.0
    %826 = vmatprep.subr.mxu0 0.0
    %827 = vmatpush1.msra.mxu0 0.0
    %828 = vmatprep.subr.mxu0 0.0
    %829 = vmatpush1.msra.mxu0 0.0
    %830 = vmatprep.subr.mxu0 0.0
    %831 = vmatpush1.msra.mxu0 0.0
    %832 = vmatprep.subr.mxu0 0.0
    %833 = vmatpush1.msra.mxu0 0.0
    %834 = vmatprep.mubr.f32.mxu0 0.0
    %835 = vmatmul.mubr.f32.gmra.mrb[0].mxu0 %v768
    %v836 = vpop.f32.mrb[0].mxu0
    %v837 = vadd.f32 0.0, %v836
    %v838 = vpop.f32.mrb[0].mxu0
    %839 = vdwg.mxu0
    %v840 = vmul.f32 %v65, %v837
    %v841 = vadd.f32 %v763, %v840
    %v842 = vtanh.pop %v841
    %v844 = vsel %vm76, %v842, 0
    %846 = vmatprep.subr.mxu0 0.0
    %847 = vmatpush1.msra.mxu0 %v59
    %848 = vmatprep.subr.mxu0 0.0
    %849 = vmatpush1.msra.mxu0 %v60
    %850 = vmatprep.subr.mxu0 0.0
    %851 = vmatpush1.msra.mxu0 %v61
    %852 = vmatprep.subr.mxu0 0.0
    %853 = vmatpush1.msra.mxu0 %v62
    %854 = vmatprep.subr.mxu0 0.0
    %855 = vmatpush1.msra.mxu0 0.0
    %856 = vmatprep.subr.mxu0 0.0
    %857 = vmatpush1.msra.mxu0 0.0
    %858 = vmatprep.subr.mxu0 0.0
    %859 = vmatpush1.msra.mxu0 0.0
    %860 = vmatprep.subr.mxu0 0.0
    %861 = vmatpush1.msra.mxu0 0.0
    %862 = vmatprep.subr.mxu0 0.0
    %863 = vmatpush1.msra.mxu0 0.0
    %864 = vmatprep.subr.mxu0 0.0
    %865 = vmatpush1.msra.mxu0 0.0
    %866 = vmatprep.subr.mxu0 0.0
    %867 = vmatpush1.msra.mxu0 0.0
    %868 = vmatprep.subr.mxu0 0.0
    %869 = vmatpush1.msra.mxu0 0.0
    %870 = vmatprep.subr.mxu0 0.0
    %871 = vmatpush1.msra.mxu0 0.0
    %872 = vmatprep.subr.mxu0 0.0
    %873 = vmatpush1.msra.mxu0 0.0
    %874 = vmatprep.subr.mxu0 0.0
    %875 = vmatpush1.msra.mxu0 0.0
    %876 = vmatprep.subr.mxu0 0.0
    %877 = vmatpush1.msra.mxu0 0.0
    %878 = vmatprep.subr.mxu0 0.0
    %879 = vmatpush1.msra.mxu0 0.0
    %880 = vmatprep.subr.mxu0 0.0
    %881 = vmatpush1.msra.mxu0 0.0
    %882 = vmatprep.subr.mxu0 0.0
    %883 = vmatpush1.msra.mxu0 0.0
    %884 = vmatprep.subr.mxu0 0.0
    %885 = vmatpush1.msra.mxu0 0.0
    %886 = vmatprep.subr.mxu0 0.0
    %887 = vmatpush1.msra.mxu0 0.0
    %888 = vmatprep.subr.mxu0 0.0
    %889 = vmatpush1.msra.mxu0 0.0
    %890 = vmatprep.subr.mxu0 0.0
    %891 = vmatpush1.msra.mxu0 0.0
    %892 = vmatprep.subr.mxu0 0.0
    %893 = vmatpush1.msra.mxu0 0.0
    %894 = vmatprep.subr.mxu0 0.0
    %895 = vmatpush1.msra.mxu0 0.0
    %896 = vmatprep.subr.mxu0 0.0
    %897 = vmatpush1.msra.mxu0 0.0
    %898 = vmatprep.subr.mxu0 0.0
    %899 = vmatpush1.msra.mxu0 0.0
    %900 = vmatprep.subr.mxu0 0.0
    %901 = vmatpush1.msra.mxu0 0.0
    %902 = vmatprep.subr.mxu0 0.0
    %903 = vmatpush1.msra.mxu0 0.0
    %904 = vmatprep.subr.mxu0 0.0
    %905 = vmatpush1.msra.mxu0 0.0
    %906 = vmatprep.subr.mxu0 0.0
    %907 = vmatpush1.msra.mxu0 0.0
    %908 = vmatprep.subr.mxu0 0.0
    %909 = vmatpush1.msra.mxu0 0.0
    %910 = vmatprep.mubr.f32.mxu0 0.0
    %911 = vmatmul.mubr.f32.gmra.mrb[0].mxu0 %v844
    %v912 = vpop.f32.mrb[0].mxu0
    %v913 = vadd.f32 0.0, %v912
    %v914 = vpop.f32.mrb[0].mxu0
    %915 = vdwg.mxu0
    %v916 = vmul.f32 %v65, %v913
    %v917 = vadd.f32 %v763, %v916
    %v918 = vtanh.pop %v917
    %v919 = vadd.f32 %v842, %v918
    %v920 = vadd.f32 %v919, %v919
    %v921 = vadd.f32 %v766, %v920
    %v923 = vsel %vm76, %v918, 0
    %925 = vmatprep.subr.mxu0 0.0
    %926 = vmatpush1.msra.mxu0 %v59
    %927 = vmatprep.subr.mxu0 0.0
    %928 = vmatpush1.msra.mxu0 %v60
    %929 = vmatprep.subr.mxu0 0.0
    %930 = vmatpush1.msra.mxu0 %v61
    %931 = vmatprep.subr.mxu0 0.0
    %932 = vmatpush1.msra.mxu0 %v62
    %933 = vmatprep.subr.mxu0 0.0
    %934 = vmatpush1.msra.mxu0 0.0
    %935 = vmatprep.subr.mxu0 0.0
    %936 = vmatpush1.msra.mxu0 0.0
    %937 = vmatprep.subr.mxu0 0.0
    %938 = vmatpush1.msra.mxu0 0.0
    %939 = vmatprep.subr.mxu0 0.0
    %940 = vmatpush1.msra.mxu0 0.0
    %941 = vmatprep.subr.mxu0 0.0
    %942 = vmatpush1.msra.mxu0 0.0
    %943 = vmatprep.subr.mxu0 0.0
    %944 = vmatpush1.msra.mxu0 0.0
    %945 = vmatprep.subr.mxu0 0.0
    %946 = vmatpush1.msra.mxu0 0.0
    %947 = vmatprep.subr.mxu0 0.0
    %948 = vmatpush1.msra.mxu0 0.0
    %949 = vmatprep.subr.mxu0 0.0
    %950 = vmatpush1.msra.mxu0 0.0
    %951 = vmatprep.subr.mxu0 0.0
    %952 = vmatpush1.msra.mxu0 0.0
    %953 = vmatprep.subr.mxu0 0.0
    %954 = vmatpush1.msra.mxu0 0.0
    %955 = vmatprep.subr.mxu0 0.0
    %956 = vmatpush1.msra.mxu0 0.0
    %957 = vmatprep.subr.mxu0 0.0
    %958 = vmatpush1.msra.mxu0 0.0
    %959 = vmatprep.subr.mxu0 0.0
    %960 = vmatpush1.msra.mxu0 0.0
    %961 = vmatprep.subr.mxu0 0.0
    %962 = vmatpush1.msra.mxu0 0.0
    %963 = vmatprep.subr.mxu0 0.0
    %964 = vmatpush1.msra.mxu0 0.0
    %965 = vmatprep.subr.mxu0 0.0
    %966 = vmatpush1.msra.mxu0 0.0
    %967 = vmatprep.subr.mxu0 0.0
    %968 = vmatpush1.msra.mxu0 0.0
    %969 = vmatprep.subr.mxu0 0.0
    %970 = vmatpush1.msra.mxu0 0.0
    %971 = vmatprep.subr.mxu0 0.0
    %972 = vmatpush1.msra.mxu0 0.0
    %973 = vmatprep.subr.mxu0 0.0
    %974 = vmatpush1.msra.mxu0 0.0
    %975 = vmatprep.subr.mxu0 0.0
    %976 = vmatpush1.msra.mxu0 0.0
    %977 = vmatprep.subr.mxu0 0.0
    %978 = vmatpush1.msra.mxu0 0.0
    %979 = vmatprep.subr.mxu0 0.0
    %980 = vmatpush1.msra.mxu0 0.0
    %981 = vmatprep.subr.mxu0 0.0
    %982 = vmatpush1.msra.mxu0 0.0
    %983 = vmatprep.subr.mxu0 0.0
    %984 = vmatpush1.msra.mxu0 0.0
    %985 = vmatprep.subr.mxu0 0.0
    %986 = vmatpush1.msra.mxu0 0.0
    %987 = vmatprep.subr.mxu0 0.0
    %988 = vmatpush1.msra.mxu0 0.0
    %989 = vmatprep.mubr.f32.mxu0 0.0
    %990 = vmatmul.mubr.f32.gmra.mrb[0].mxu0 %v923
    %v991 = vpop.f32.mrb[0].mxu0
    %v992 = vadd.f32 0.0, %v991
    %v993 = vpop.f32.mrb[0].mxu0
    %994 = vdwg.mxu0
    %v995 = vmul.f32 %v66, %v992
    %v996 = vadd.f32 %v763, %v995
    %v997 = vtanh.pop %v996
    %v998 = vadd.f32 %v921, %v997
    %v999 = vmul.f32 %v68, %v998
    %v1000 = vadd.f32 %v692, %v999
    %v1002 = vsel %vm76, %v1000, 0
    %1004 = vmatprep.subr.mxu0 0.0
    %1005 = vmatpush1.msra.mxu0 %v59
    %1006 = vmatprep.subr.mxu0 0.0
    %1007 = vmatpush1.msra.mxu0 %v60
    %1008 = vmatprep.subr.mxu0 0.0
    %1009 = vmatpush1.msra.mxu0 %v61
    %1010 = vmatprep.subr.mxu0 0.0
    %1011 = vmatpush1.msra.mxu0 %v62
    %1012 = vmatprep.subr.mxu0 0.0
    %1013 = vmatpush1.msra.mxu0 0.0
    %1014 = vmatprep.subr.mxu0 0.0
    %1015 = vmatpush1.msra.mxu0 0.0
    %1016 = vmatprep.subr.mxu0 0.0
    %1017 = vmatpush1.msra.mxu0 0.0
    %1018 = vmatprep.subr.mxu0 0.0
    %1019 = vmatpush1.msra.mxu0 0.0
    %1020 = vmatprep.subr.mxu0 0.0
    %1021 = vmatpush1.msra.mxu0 0.0
    %1022 = vmatprep.subr.mxu0 0.0
    %1023 = vmatpush1.msra.mxu0 0.0
    %1024 = vmatprep.subr.mxu0 0.0
    %1025 = vmatpush1.msra.mxu0 0.0
    %1026 = vmatprep.subr.mxu0 0.0
    %1027 = vmatpush1.msra.mxu0 0.0
    %1028 = vmatprep.subr.mxu0 0.0
    %1029 = vmatpush1.msra.mxu0 0.0
    %1030 = vmatprep.subr.mxu0 0.0
    %1031 = vmatpush1.msra.mxu0 0.0
    %1032 = vmatprep.subr.mxu0 0.0
    %1033 = vmatpush1.msra.mxu0 0.0
    %1034 = vmatprep.subr.mxu0 0.0
    %1035 = vmatpush1.msra.mxu0 0.0
    %1036 = vmatprep.subr.mxu0 0.0
    %1037 = vmatpush1.msra.mxu0 0.0
    %1038 = vmatprep.subr.mxu0 0.0
    %1039 = vmatpush1.msra.mxu0 0.0
    %1040 = vmatprep.subr.mxu0 0.0
    %1041 = vmatpush1.msra.mxu0 0.0
    %1042 = vmatprep.subr.mxu0 0.0
    %1043 = vmatpush1.msra.mxu0 0.0
    %1044 = vmatprep.subr.mxu0 0.0
    %1045 = vmatpush1.msra.mxu0 0.0
    %1046 = vmatprep.subr.mxu0 0.0
    %1047 = vmatpush1.msra.mxu0 0.0
    %1048 = vmatprep.subr.mxu0 0.0
    %1049 = vmatpush1.msra.mxu0 0.0
    %1050 = vmatprep.subr.mxu0 0.0
    %1051 = vmatpush1.msra.mxu0 0.0
    %1052 = vmatprep.subr.mxu0 0.0
    %1053 = vmatpush1.msra.mxu0 0.0
    %1054 = vmatprep.subr.mxu0 0.0
    %1055 = vmatpush1.msra.mxu0 0.0
    %1056 = vmatprep.subr.mxu0 0.0
    %1057 = vmatpush1.msra.mxu0 0.0
    %1058 = vmatprep.subr.mxu0 0.0
    %1059 = vmatpush1.msra.mxu0 0.0
    %1060 = vmatprep.subr.mxu0 0.0
    %1061 = vmatpush1.msra.mxu0 0.0
    %1062 = vmatprep.subr.mxu0 0.0
    %1063 = vmatpush1.msra.mxu0 0.0
    %1064 = vmatprep.subr.mxu0 0.0
    %1065 = vmatpush1.msra.mxu0 0.0
    %1066 = vmatprep.subr.mxu0 0.0
    %1067 = vmatpush1.msra.mxu0 0.0
    %1068 = vmatprep.mubr.f32.mxu0 0.0
    %1069 = vmatmul.mubr.f32.gmra.mrb[0].mxu0 %v1002
    %v1070 = vpop.f32.mrb[0].mxu0
    %v1071 = vadd.f32 %v74, %v1070
    %v1072 = vpop.f32.mrb[0].mxu0
    %1073 = vdwg.mxu0
    %v1074 = vtanh.pop %v1071
    %v1076 = vsel %vm76, %v1074, 0
    %1078 = vmatprep.subr.mxu0 0.0
    %1079 = vmatpush1.msra.mxu0 %v59
    %1080 = vmatprep.subr.mxu0 0.0
    %1081 = vmatpush1.msra.mxu0 %v60
    %1082 = vmatprep.subr.mxu0 0.0
    %1083 = vmatpush1.msra.mxu0 %v61
    %1084 = vmatprep.subr.mxu0 0.0
    %1085 = vmatpush1.msra.mxu0 %v62
    %1086 = vmatprep.subr.mxu0 0.0
    %1087 = vmatpush1.msra.mxu0 0.0
    %1088 = vmatprep.subr.mxu0 0.0
    %1089 = vmatpush1.msra.mxu0 0.0
    %1090 = vmatprep.subr.mxu0 0.0
    %1091 = vmatpush1.msra.mxu0 0.0
    %1092 = vmatprep.subr.mxu0 0.0
    %1093 = vmatpush1.msra.mxu0 0.0
    %1094 = vmatprep.subr.mxu0 0.0
    %1095 = vmatpush1.msra.mxu0 0.0
    %1096 = vmatprep.subr.mxu0 0.0
    %1097 = vmatpush1.msra.mxu0 0.0
    %1098 = vmatprep.subr.mxu0 0.0
    %1099 = vmatpush1.msra.mxu0 0.0
    %1100 = vmatprep.subr.mxu0 0.0
    %1101 = vmatpush1.msra.mxu0 0.0
    %1102 = vmatprep.subr.mxu0 0.0
    %1103 = vmatpush1.msra.mxu0 0.0
    %1104 = vmatprep.subr.mxu0 0.0
    %1105 = vmatpush1.msra.mxu0 0.0
    %1106 = vmatprep.subr.mxu0 0.0
    %1107 = vmatpush1.msra.mxu0 0.0
    %1108 = vmatprep.subr.mxu0 0.0
    %1109 = vmatpush1.msra.mxu0 0.0
    %1110 = vmatprep.subr.mxu0 0.0
    %1111 = vmatpush1.msra.mxu0 0.0
    %1112 = vmatprep.subr.mxu0 0.0
    %1113 = vmatpush1.msra.mxu0 0.0
    %1114 = vmatprep.subr.mxu0 0.0
    %1115 = vmatpush1.msra.mxu0 0.0
    %1116 = vmatprep.subr.mxu0 0.0
    %1117 = vmatpush1.msra.mxu0 0.0
    %1118 = vmatprep.subr.mxu0 0.0
    %1119 = vmatpush1.msra.mxu0 0.0
    %1120 = vmatprep.subr.mxu0 0.0
    %1121 = vmatpush1.msra.mxu0 0.0
    %1122 = vmatprep.subr.mxu0 0.0
    %1123 = vmatpush1.msra.mxu0 0.0
    %1124 = vmatprep.subr.mxu0 0.0
    %1125 = vmatpush1.msra.mxu0 0.0
    %1126 = vmatprep.subr.mxu0 0.0
    %1127 = vmatpush1.msra.mxu0 0.0
    %1128 = vmatprep.subr.mxu0 0.0
    %1129 = vmatpush1.msra.mxu0 0.0
    %1130 = vmatprep.subr.mxu0 0.0
    %1131 = vmatpush1.msra.mxu0 0.0
    %1132 = vmatprep.subr.mxu0 0.0
    %1133 = vmatpush1.msra.mxu0 0.0
    %1134 = vmatprep.subr.mxu0 0.0
    %1135 = vmatpush1.msra.mxu0 0.0
    %1136 = vmatprep.subr.mxu0 0.0
    %1137 = vmatpush1.msra.mxu0 0.0
    %1138 = vmatprep.subr.mxu0 0.0
    %1139 = vmatpush1.msra.mxu0 0.0
    %1140 = vmatprep.subr.mxu0 0.0
    %1141 = vmatpush1.msra.mxu0 0.0
    %1142 = vmatprep.mubr.f32.mxu0 0.0
    %1143 = vmatmul.mubr.f32.gmra.mrb[0].mxu0 %v1076
    %v1144 = vpop.f32.mrb[0].mxu0
    %v1145 = vadd.f32 0.0, %v1144
    %v1146 = vpop.f32.mrb[0].mxu0
    %1147 = vdwg.mxu0
    %v1148 = vmul.f32 %v65, %v1145
    %v1149 = vadd.f32 %v1071, %v1148
    %v1150 = vtanh.pop %v1149
    %v1152 = vsel %vm76, %v1150, 0
    %1154 = vmatprep.subr.mxu0 0.0
    %1155 = vmatpush1.msra.mxu0 %v59
    %1156 = vmatprep.subr.mxu0 0.0
    %1157 = vmatpush1.msra.mxu0 %v60
    %1158 = vmatprep.subr.mxu0 0.0
    %1159 = vmatpush1.msra.mxu0 %v61
    %1160 = vmatprep.subr.mxu0 0.0
    %1161 = vmatpush1.msra.mxu0 %v62
    %1162 = vmatprep.subr.mxu0 0.0
    %1163 = vmatpush1.msra.mxu0 0.0
    %1164 = vmatprep.subr.mxu0 0.0
    %1165 = vmatpush1.msra.mxu0 0.0
    %1166 = vmatprep.subr.mxu0 0.0
    %1167 = vmatpush1.msra.mxu0 0.0
    %1168 = vmatprep.subr.mxu0 0.0
    %1169 = vmatpush1.msra.mxu0 0.0
    %1170 = vmatprep.subr.mxu0 0.0
    %1171 = vmatpush1.msra.mxu0 0.0
    %1172 = vmatprep.subr.mxu0 0.0
    %1173 = vmatpush1.msra.mxu0 0.0
    %1174 = vmatprep.subr.mxu0 0.0
    %1175 = vmatpush1.msra.mxu0 0.0
    %1176 = vmatprep.subr.mxu0 0.0
    %1177 = vmatpush1.msra.mxu0 0.0
    %1178 = vmatprep.subr.mxu0 0.0
    %1179 = vmatpush1.msra.mxu0 0.0
    %1180 = vmatprep.subr.mxu0 0.0
    %1181 = vmatpush1.msra.mxu0 0.0
    %1182 = vmatprep.subr.mxu0 0.0
    %1183 = vmatpush1.msra.mxu0 0.0
    %1184 = vmatprep.subr.mxu0 0.0
    %1185 = vmatpush1.msra.mxu0 0.0
    %1186 = vmatprep.subr.mxu0 0.0
    %1187 = vmatpush1.msra.mxu0 0.0
    %1188 = vmatprep.subr.mxu0 0.0
    %1189 = vmatpush1.msra.mxu0 0.0
    %1190 = vmatprep.subr.mxu0 0.0
    %1191 = vmatpush1.msra.mxu0 0.0
    %1192 = vmatprep.subr.mxu0 0.0
    %1193 = vmatpush1.msra.mxu0 0.0
    %1194 = vmatprep.subr.mxu0 0.0
    %1195 = vmatpush1.msra.mxu0 0.0
    %1196 = vmatprep.subr.mxu0 0.0
    %1197 = vmatpush1.msra.mxu0 0.0
    %1198 = vmatprep.subr.mxu0 0.0
    %1199 = vmatpush1.msra.mxu0 0.0
    %1200 = vmatprep.subr.mxu0 0.0
    %1201 = vmatpush1.msra.mxu0 0.0
    %1202 = vmatprep.subr.mxu0 0.0
    %1203 = vmatpush1.msra.mxu0 0.0
    %1204 = vmatprep.subr.mxu0 0.0
    %1205 = vmatpush1.msra.mxu0 0.0
    %1206 = vmatprep.subr.mxu0 0.0
    %1207 = vmatpush1.msra.mxu0 0.0
    %1208 = vmatprep.subr.mxu0 0.0
    %1209 = vmatpush1.msra.mxu0 0.0
    %1210 = vmatprep.subr.mxu0 0.0
    %1211 = vmatpush1.msra.mxu0 0.0
    %1212 = vmatprep.subr.mxu0 0.0
    %1213 = vmatpush1.msra.mxu0 0.0
    %1214 = vmatprep.subr.mxu0 0.0
    %1215 = vmatpush1.msra.mxu0 0.0
    %1216 = vmatprep.subr.mxu0 0.0
    %1217 = vmatpush1.msra.mxu0 0.0
    %1218 = vmatprep.mubr.f32.mxu0 0.0
    %1219 = vmatmul.mubr.f32.gmra.mrb[0].mxu0 %v1152
    %v1220 = vpop.f32.mrb[0].mxu0
    %v1221 = vadd.f32 0.0, %v1220
    %v1222 = vpop.f32.mrb[0].mxu0
    %1223 = vdwg.mxu0
    %v1224 = vmul.f32 %v65, %v1221
    %v1225 = vadd.f32 %v1071, %v1224
    %v1226 = vtanh.pop %v1225
    %v1227 = vadd.f32 %v1150, %v1226
    %v1228 = vadd.f32 %v1227, %v1227
    %v1229 = vadd.f32 %v1074, %v1228
    %v1231 = vsel %vm76, %v1226, 0
    %1233 = vmatprep.subr.mxu0 0.0
    %1234 = vmatpush1.msra.mxu0 %v59
    %1235 = vmatprep.subr.mxu0 0.0
    %1236 = vmatpush1.msra.mxu0 %v60
    %1237 = vmatprep.subr.mxu0 0.0
    %1238 = vmatpush1.msra.mxu0 %v61
    %1239 = vmatprep.subr.mxu0 0.0
    %1240 = vmatpush1.msra.mxu0 %v62
    %1241 = vmatprep.subr.mxu0 0.0
    %1242 = vmatpush1.msra.mxu0 0.0
    %1243 = vmatprep.subr.mxu0 0.0
    %1244 = vmatpush1.msra.mxu0 0.0
    %1245 = vmatprep.subr.mxu0 0.0
    %1246 = vmatpush1.msra.mxu0 0.0
    %1247 = vmatprep.subr.mxu0 0.0
    %1248 = vmatpush1.msra.mxu0 0.0
    %1249 = vmatprep.subr.mxu0 0.0
    %1250 = vmatpush1.msra.mxu0 0.0
    %1251 = vmatprep.subr.mxu0 0.0
    %1252 = vmatpush1.msra.mxu0 0.0
    %1253 = vmatprep.subr.mxu0 0.0
    %1254 = vmatpush1.msra.mxu0 0.0
    %1255 = vmatprep.subr.mxu0 0.0
    %1256 = vmatpush1.msra.mxu0 0.0
    %1257 = vmatprep.subr.mxu0 0.0
    %1258 = vmatpush1.msra.mxu0 0.0
    %1259 = vmatprep.subr.mxu0 0.0
    %1260 = vmatpush1.msra.mxu0 0.0
    %1261 = vmatprep.subr.mxu0 0.0
    %1262 = vmatpush1.msra.mxu0 0.0
    %1263 = vmatprep.subr.mxu0 0.0
    %1264 = vmatpush1.msra.mxu0 0.0
    %1265 = vmatprep.subr.mxu0 0.0
    %1266 = vmatpush1.msra.mxu0 0.0
    %1267 = vmatprep.subr.mxu0 0.0
    %1268 = vmatpush1.msra.mxu0 0.0
    %1269 = vmatprep.subr.mxu0 0.0
    %1270 = vmatpush1.msra.mxu0 0.0
    %1271 = vmatprep.subr.mxu0 0.0
    %1272 = vmatpush1.msra.mxu0 0.0
    %1273 = vmatprep.subr.mxu0 0.0
    %1274 = vmatpush1.msra.mxu0 0.0
    %1275 = vmatprep.subr.mxu0 0.0
    %1276 = vmatpush1.msra.mxu0 0.0
    %1277 = vmatprep.subr.mxu0 0.0
    %1278 = vmatpush1.msra.mxu0 0.0
    %1279 = vmatprep.subr.mxu0 0.0
    %1280 = vmatpush1.msra.mxu0 0.0
    %1281 = vmatprep.subr.mxu0 0.0
    %1282 = vmatpush1.msra.mxu0 0.0
    %1283 = vmatprep.subr.mxu0 0.0
    %1284 = vmatpush1.msra.mxu0 0.0
    %1285 = vmatprep.subr.mxu0 0.0
    %1286 = vmatpush1.msra.mxu0 0.0
    %1287 = vmatprep.subr.mxu0 0.0
    %1288 = vmatpush1.msra.mxu0 0.0
    %1289 = vmatprep.subr.mxu0 0.0
    %1290 = vmatpush1.msra.mxu0 0.0
    %1291 = vmatprep.subr.mxu0 0.0
    %1292 = vmatpush1.msra.mxu0 0.0
    %1293 = vmatprep.subr.mxu0 0.0
    %1294 = vmatpush1.msra.mxu0 0.0
    %1295 = vmatprep.subr.mxu0 0.0
    %1296 = vmatpush1.msra.mxu0 0.0
    %1297 = vmatprep.mubr.f32.mxu0 0.0
    %1298 = vmatmul.mubr.f32.gmra.mrb[0].mxu0 %v1231
    %v1299 = vpop.f32.mrb[0].mxu0
    %v1300 = vadd.f32 0.0, %v1299
    %v1301 = vpop.f32.mrb[0].mxu0
    %1302 = vdwg.mxu0
    %v1303 = vmul.f32 %v66, %v1300
    %v1304 = vadd.f32 %v1071, %v1303
    %v1305 = vtanh.pop %v1304
    %v1306 = vadd.f32 %v1229, %v1305
    %v1307 = vmul.f32 %v68, %v1306
    %v1308 = vadd.f32 %v1000, %v1307
    %v1310 = vsel %vm76, %v1308, 0
    %1312 = vmatprep.subr.mxu0 0.0
    %1313 = vmatpush1.msra.mxu0 %v59
    %1314 = vmatprep.subr.mxu0 0.0
    %1315 = vmatpush1.msra.mxu0 %v60
    %1316 = vmatprep.subr.mxu0 0.0
    %1317 = vmatpush1.msra.mxu0 %v61
    %1318 = vmatprep.subr.mxu0 0.0
    %1319 = vmatpush1.msra.mxu0 %v62
    %1320 = vmatprep.subr.mxu0 0.0
    %1321 = vmatpush1.msra.mxu0 0.0
    %1322 = vmatprep.subr.mxu0 0.0
    %1323 = vmatpush1.msra.mxu0 0.0
    %1324 = vmatprep.subr.mxu0 0.0
    %1325 = vmatpush1.msra.mxu0 0.0
    %1326 = vmatprep.subr.mxu0 0.0
    %1327 = vmatpush1.msra.mxu0 0.0
    %1328 = vmatprep.subr.mxu0 0.0
    %1329 = vmatpush1.msra.mxu0 0.0
    %1330 = vmatprep.subr.mxu0 0.0
    %1331 = vmatpush1.msra.mxu0 0.0
    %1332 = vmatprep.subr.mxu0 0.0
    %1333 = vmatpush1.msra.mxu0 0.0
    %1334 = vmatprep.subr.mxu0 0.0
    %1335 = vmatpush1.msra.mxu0 0.0
    %1336 = vmatprep.subr.mxu0 0.0
    %1337 = vmatpush1.msra.mxu0 0.0
    %1338 = vmatprep.subr.mxu0 0.0
    %1339 = vmatpush1.msra.mxu0 0.0
    %1340 = vmatprep.subr.mxu0 0.0
    %1341 = vmatpush1.msra.mxu0 0.0
    %1342 = vmatprep.subr.mxu0 0.0
    %1343 = vmatpush1.msra.mxu0 0.0
    %1344 = vmatprep.subr.mxu0 0.0
    %1345 = vmatpush1.msra.mxu0 0.0
    %1346 = vmatprep.subr.mxu0 0.0
    %1347 = vmatpush1.msra.mxu0 0.0
    %1348 = vmatprep.subr.mxu0 0.0
    %1349 = vmatpush1.msra.mxu0 0.0
    %1350 = vmatprep.subr.mxu0 0.0
    %1351 = vmatpush1.msra.mxu0 0.0
    %1352 = vmatprep.subr.mxu0 0.0
    %1353 = vmatpush1.msra.mxu0 0.0
    %1354 = vmatprep.subr.mxu0 0.0
    %1355 = vmatpush1.msra.mxu0 0.0
    %1356 = vmatprep.subr.mxu0 0.0
    %1357 = vmatpush1.msra.mxu0 0.0
    %1358 = vmatprep.subr.mxu0 0.0
    %1359 = vmatpush1.msra.mxu0 0.0
    %1360 = vmatprep.subr.mxu0 0.0
    %1361 = vmatpush1.msra.mxu0 0.0
    %1362 = vmatprep.subr.mxu0 0.0
    %1363 = vmatpush1.msra.mxu0 0.0
    %1364 = vmatprep.subr.mxu0 0.0
    %1365 = vmatpush1.msra.mxu0 0.0
    %1366 = vmatprep.subr.mxu0 0.0
    %1367 = vmatpush1.msra.mxu0 0.0
    %1368 = vmatprep.subr.mxu0 0.0
    %1369 = vmatpush1.msra.mxu0 0.0
    %1370 = vmatprep.subr.mxu0 0.0
    %1371 = vmatpush1.msra.mxu0 0.0
    %1372 = vmatprep.subr.mxu0 0.0
    %1373 = vmatpush1.msra.mxu0 0.0
    %1374 = vmatprep.subr.mxu0 0.0
    %1375 = vmatpush1.msra.mxu0 0.0
    %1376 = vmatprep.mubr.f32.mxu0 0.0
    %1377 = vmatmul.mubr.f32.gmra.mrb[0].mxu0 %v1310
    %v1378 = vpop.f32.mrb[0].mxu0
    %v1379 = vadd.f32 %v74, %v1378
    %v1380 = vpop.f32.mrb[0].mxu0
    %1381 = vdwg.mxu0
    %v1382 = vtanh.pop %v1379
    %v1384 = vsel %vm76, %v1382, 0
    %1386 = vmatprep.subr.mxu0 0.0
    %1387 = vmatpush1.msra.mxu0 %v59
    %1388 = vmatprep.subr.mxu0 0.0
    %1389 = vmatpush1.msra.mxu0 %v60
    %1390 = vmatprep.subr.mxu0 0.0
    %1391 = vmatpush1.msra.mxu0 %v61
    %1392 = vmatprep.subr.mxu0 0.0
    %1393 = vmatpush1.msra.mxu0 %v62
    %1394 = vmatprep.subr.mxu0 0.0
    %1395 = vmatpush1.msra.mxu0 0.0
    %1396 = vmatprep.subr.mxu0 0.0
    %1397 = vmatpush1.msra.mxu0 0.0
    %1398 = vmatprep.subr.mxu0 0.0
    %1399 = vmatpush1.msra.mxu0 0.0
    %1400 = vmatprep.subr.mxu0 0.0
    %1401 = vmatpush1.msra.mxu0 0.0
    %1402 = vmatprep.subr.mxu0 0.0
    %1403 = vmatpush1.msra.mxu0 0.0
    %1404 = vmatprep.subr.mxu0 0.0
    %1405 = vmatpush1.msra.mxu0 0.0
    %1406 = vmatprep.subr.mxu0 0.0
    %1407 = vmatpush1.msra.mxu0 0.0
    %1408 = vmatprep.subr.mxu0 0.0
    %1409 = vmatpush1.msra.mxu0 0.0
    %1410 = vmatprep.subr.mxu0 0.0
    %1411 = vmatpush1.msra.mxu0 0.0
    %1412 = vmatprep.subr.mxu0 0.0
    %1413 = vmatpush1.msra.mxu0 0.0
    %1414 = vmatprep.subr.mxu0 0.0
    %1415 = vmatpush1.msra.mxu0 0.0
    %1416 = vmatprep.subr.mxu0 0.0
    %1417 = vmatpush1.msra.mxu0 0.0
    %1418 = vmatprep.subr.mxu0 0.0
    %1419 = vmatpush1.msra.mxu0 0.0
    %1420 = vmatprep.subr.mxu0 0.0
    %1421 = vmatpush1.msra.mxu0 0.0
    %1422 = vmatprep.subr.mxu0 0.0
    %1423 = vmatpush1.msra.mxu0 0.0
    %1424 = vmatprep.subr.mxu0 0.0
    %1425 = vmatpush1.msra.mxu0 0.0
    %1426 = vmatprep.subr.mxu0 0.0
    %1427 = vmatpush1.msra.mxu0 0.0
    %1428 = vmatprep.subr.mxu0 0.0
    %1429 = vmatpush1.msra.mxu0 0.0
    %1430 = vmatprep.subr.mxu0 0.0
    %1431 = vmatpush1.msra.mxu0 0.0
    %1432 = vmatprep.subr.mxu0 0.0
    %1433 = vmatpush1.msra.mxu0 0.0
    %1434 = vmatprep.subr.mxu0 0.0
    %1435 = vmatpush1.msra.mxu0 0.0
    %1436 = vmatprep.subr.mxu0 0.0
    %1437 = vmatpush1.msra.mxu0 0.0
    %1438 = vmatprep.subr.mxu0 0.0
    %1439 = vmatpush1.msra.mxu0 0.0
    %1440 = vmatprep.subr.mxu0 0.0
    %1441 = vmatpush1.msra.mxu0 0.0
    %1442 = vmatprep.subr.mxu0 0.0
    %1443 = vmatpush1.msra.mxu0 0.0
    %1444 = vmatprep.subr.mxu0 0.0
    %1445 = vmatpush1.msra.mxu0 0.0
    %1446 = vmatprep.subr.mxu0 0.0
    %1447 = vmatpush1.msra.mxu0 0.0
    %1448 = vmatprep.subr.mxu0 0.0
    %1449 = vmatpush1.msra.mxu0 0.0
    %1450 = vmatprep.mubr.f32.mxu0 0.0
    %1451 = vmatmul.mubr.f32.gmra.mrb[0].mxu0 %v1384
    %v1452 = vpop.f32.mrb[0].mxu0
    %v1453 = vadd.f32 0.0, %v1452
    %v1454 = vpop.f32.mrb[0].mxu0
    %1455 = vdwg.mxu0
    %v1456 = vmul.f32 %v65, %v1453
    %v1457 = vadd.f32 %v1379, %v1456
    %v1458 = vtanh.pop %v1457
    %v1460 = vsel %vm76, %v1458, 0
    %1462 = vmatprep.subr.mxu0 0.0
    %1463 = vmatpush1.msra.mxu0 %v59
    %1464 = vmatprep.subr.mxu0 0.0
    %1465 = vmatpush1.msra.mxu0 %v60
    %1466 = vmatprep.subr.mxu0 0.0
    %1467 = vmatpush1.msra.mxu0 %v61
    %1468 = vmatprep.subr.mxu0 0.0
    %1469 = vmatpush1.msra.mxu0 %v62
    %1470 = vmatprep.subr.mxu0 0.0
    %1471 = vmatpush1.msra.mxu0 0.0
    %1472 = vmatprep.subr.mxu0 0.0
    %1473 = vmatpush1.msra.mxu0 0.0
    %1474 = vmatprep.subr.mxu0 0.0
    %1475 = vmatpush1.msra.mxu0 0.0
    %1476 = vmatprep.subr.mxu0 0.0
    %1477 = vmatpush1.msra.mxu0 0.0
    %1478 = vmatprep.subr.mxu0 0.0
    %1479 = vmatpush1.msra.mxu0 0.0
    %1480 = vmatprep.subr.mxu0 0.0
    %1481 = vmatpush1.msra.mxu0 0.0
    %1482 = vmatprep.subr.mxu0 0.0
    %1483 = vmatpush1.msra.mxu0 0.0
    %1484 = vmatprep.subr.mxu0 0.0
    %1485 = vmatpush1.msra.mxu0 0.0
    %1486 = vmatprep.subr.mxu0 0.0
    %1487 = vmatpush1.msra.mxu0 0.0
    %1488 = vmatprep.subr.mxu0 0.0
    %1489 = vmatpush1.msra.mxu0 0.0
    %1490 = vmatprep.subr.mxu0 0.0
    %1491 = vmatpush1.msra.mxu0 0.0
    %1492 = vmatprep.subr.mxu0 0.0
    %1493 = vmatpush1.msra.mxu0 0.0
    %1494 = vmatprep.subr.mxu0 0.0
    %1495 = vmatpush1.msra.mxu0 0.0
    %1496 = vmatprep.subr.mxu0 0.0
    %1497 = vmatpush1.msra.mxu0 0.0
    %1498 = vmatprep.subr.mxu0 0.0
    %1499 = vmatpush1.msra.mxu0 0.0
    %1500 = vmatprep.subr.mxu0 0.0
    %1501 = vmatpush1.msra.mxu0 0.0
    %1502 = vmatprep.subr.mxu0 0.0
    %1503 = vmatpush1.msra.mxu0 0.0
    %1504 = vmatprep.subr.mxu0 0.0
    %1505 = vmatpush1.msra.mxu0 0.0
    %1506 = vmatprep.subr.mxu0 0.0
    %1507 = vmatpush1.msra.mxu0 0.0
    %1508 = vmatprep.subr.mxu0 0.0
    %1509 = vmatpush1.msra.mxu0 0.0
    %1510 = vmatprep.subr.mxu0 0.0
    %1511 = vmatpush1.msra.mxu0 0.0
    %1512 = vmatprep.subr.mxu0 0.0
    %1513 = vmatpush1.msra.mxu0 0.0
    %1514 = vmatprep.subr.mxu0 0.0
    %1515 = vmatpush1.msra.mxu0 0.0
    %1516 = vmatprep.subr.mxu0 0.0
    %1517 = vmatpush1.msra.mxu0 0.0
    %1518 = vmatprep.subr.mxu0 0.0
    %1519 = vmatpush1.msra.mxu0 0.0
    %1520 = vmatprep.subr.mxu0 0.0
    %1521 = vmatpush1.msra.mxu0 0.0
    %1522 = vmatprep.subr.mxu0 0.0
    %1523 = vmatpush1.msra.mxu0 0.0
    %1524 = vmatprep.subr.mxu0 0.0
    %1525 = vmatpush1.msra.mxu0 0.0
    %1526 = vmatprep.mubr.f32.mxu0 0.0
    %1527 = vmatmul.mubr.f32.gmra.mrb[0].mxu0 %v1460
    %v1528 = vpop.f32.mrb[0].mxu0
    %v1529 = vadd.f32 0.0, %v1528
    %v1530 = vpop.f32.mrb[0].mxu0
    %1531 = vdwg.mxu0
    %v1532 = vmul.f32 %v65, %v1529
    %v1533 = vadd.f32 %v1379, %v1532
    %v1534 = vtanh.pop %v1533
    %v1535 = vadd.f32 %v1458, %v1534
    %v1536 = vadd.f32 %v1535, %v1535
    %v1537 = vadd.f32 %v1382, %v1536
    %v1539 = vsel %vm76, %v1534, 0
    %1541 = vmatprep.subr.mxu0 0.0
    %1542 = vmatpush1.msra.mxu0 %v59
    %1543 = vmatprep.subr.mxu0 0.0
    %1544 = vmatpush1.msra.mxu0 %v60
    %1545 = vmatprep.subr.mxu0 0.0
    %1546 = vmatpush1.msra.mxu0 %v61
    %1547 = vmatprep.subr.mxu0 0.0
    %1548 = vmatpush1.msra.mxu0 %v62
    %1549 = vmatprep.subr.mxu0 0.0
    %1550 = vmatpush1.msra.mxu0 0.0
    %1551 = vmatprep.subr.mxu0 0.0
    %1552 = vmatpush1.msra.mxu0 0.0
    %1553 = vmatprep.subr.mxu0 0.0
    %1554 = vmatpush1.msra.mxu0 0.0
    %1555 = vmatprep.subr.mxu0 0.0
    %1556 = vmatpush1.msra.mxu0 0.0
    %1557 = vmatprep.subr.mxu0 0.0
    %1558 = vmatpush1.msra.mxu0 0.0
    %1559 = vmatprep.subr.mxu0 0.0
    %1560 = vmatpush1.msra.mxu0 0.0
    %1561 = vmatprep.subr.mxu0 0.0
    %1562 = vmatpush1.msra.mxu0 0.0
    %1563 = vmatprep.subr.mxu0 0.0
    %1564 = vmatpush1.msra.mxu0 0.0
    %1565 = vmatprep.subr.mxu0 0.0
    %1566 = vmatpush1.msra.mxu0 0.0
    %1567 = vmatprep.subr.mxu0 0.0
    %1568 = vmatpush1.msra.mxu0 0.0
    %1569 = vmatprep.subr.mxu0 0.0
    %1570 = vmatpush1.msra.mxu0 0.0
    %1571 = vmatprep.subr.mxu0 0.0
    %1572 = vmatpush1.msra.mxu0 0.0
    %1573 = vmatprep.subr.mxu0 0.0
    %1574 = vmatpush1.msra.mxu0 0.0
    %1575 = vmatprep.subr.mxu0 0.0
    %1576 = vmatpush1.msra.mxu0 0.0
    %1577 = vmatprep.subr.mxu0 0.0
    %1578 = vmatpush1.msra.mxu0 0.0
    %1579 = vmatprep.subr.mxu0 0.0
    %1580 = vmatpush1.msra.mxu0 0.0
    %1581 = vmatprep.subr.mxu0 0.0
    %1582 = vmatpush1.msra.mxu0 0.0
    %1583 = vmatprep.subr.mxu0 0.0
    %1584 = vmatpush1.msra.mxu0 0.0
    %1585 = vmatprep.subr.mxu0 0.0
    %1586 = vmatpush1.msra.mxu0 0.0
    %1587 = vmatprep.subr.mxu0 0.0
    %1588 = vmatpush1.msra.mxu0 0.0
    %1589 = vmatprep.subr.mxu0 0.0
    %1590 = vmatpush1.msra.mxu0 0.0
    %1591 = vmatprep.subr.mxu0 0.0
    %1592 = vmatpush1.msra.mxu0 0.0
    %1593 = vmatprep.subr.mxu0 0.0
    %1594 = vmatpush1.msra.mxu0 0.0
    %1595 = vmatprep.subr.mxu0 0.0
    %1596 = vmatpush1.msra.mxu0 0.0
    %1597 = vmatprep.subr.mxu0 0.0
    %1598 = vmatpush1.msra.mxu0 0.0
    %1599 = vmatprep.subr.mxu0 0.0
    %1600 = vmatpush1.msra.mxu0 0.0
    %1601 = vmatprep.subr.mxu0 0.0
    %1602 = vmatpush1.msra.mxu0 0.0
    %1603 = vmatprep.subr.mxu0 0.0
    %1604 = vmatpush1.msra.mxu0 0.0
    %1605 = vmatprep.mubr.f32.mxu0 0.0
    %1606 = vmatmul.mubr.f32.gmra.mrb[0].mxu0 %v1539
    %v1607 = vpop.f32.mrb[0].mxu0
    %v1608 = vadd.f32 0.0, %v1607
    %v1609 = vpop.f32.mrb[0].mxu0
    %1610 = vdwg.mxu0
    %v1611 = vmul.f32 %v66, %v1608
    %v1612 = vadd.f32 %v1379, %v1611
    %v1613 = vtanh.pop %v1612
    %v1614 = vadd.f32 %v1537, %v1613
    %v1615 = vmul.f32 %v68, %v1614
    %v1616 = vadd.f32 %v1308, %v1615
    %v1618 = vsel %vm76, %v1616, 0
    %1620 = vmatprep.subr.mxu0 0.0
    %1621 = vmatpush1.msra.mxu0 %v59
    %1622 = vmatprep.subr.mxu0 0.0
    %1623 = vmatpush1.msra.mxu0 %v60
    %1624 = vmatprep.subr.mxu0 0.0
    %1625 = vmatpush1.msra.mxu0 %v61
    %1626 = vmatprep.subr.mxu0 0.0
    %1627 = vmatpush1.msra.mxu0 %v62
    %1628 = vmatprep.subr.mxu0 0.0
    %1629 = vmatpush1.msra.mxu0 0.0
    %1630 = vmatprep.subr.mxu0 0.0
    %1631 = vmatpush1.msra.mxu0 0.0
    %1632 = vmatprep.subr.mxu0 0.0
    %1633 = vmatpush1.msra.mxu0 0.0
    %1634 = vmatprep.subr.mxu0 0.0
    %1635 = vmatpush1.msra.mxu0 0.0
    %1636 = vmatprep.subr.mxu0 0.0
    %1637 = vmatpush1.msra.mxu0 0.0
    %1638 = vmatprep.subr.mxu0 0.0
    %1639 = vmatpush1.msra.mxu0 0.0
    %1640 = vmatprep.subr.mxu0 0.0
    %1641 = vmatpush1.msra.mxu0 0.0
    %1642 = vmatprep.subr.mxu0 0.0
    %1643 = vmatpush1.msra.mxu0 0.0
    %1644 = vmatprep.subr.mxu0 0.0
    %1645 = vmatpush1.msra.mxu0 0.0
    %1646 = vmatprep.subr.mxu0 0.0
    %1647 = vmatpush1.msra.mxu0 0.0
    %1648 = vmatprep.subr.mxu0 0.0
    %1649 = vmatpush1.msra.mxu0 0.0
    %1650 = vmatprep.subr.mxu0 0.0
    %1651 = vmatpush1.msra.mxu0 0.0
    %1652 = vmatprep.subr.mxu0 0.0
    %1653 = vmatpush1.msra.mxu0 0.0
    %1654 = vmatprep.subr.mxu0 0.0
    %1655 = vmatpush1.msra.mxu0 0.0
    %1656 = vmatprep.subr.mxu0 0.0
    %1657 = vmatpush1.msra.mxu0 0.0
    %1658 = vmatprep.subr.mxu0 0.0
    %1659 = vmatpush1.msra.mxu0 0.0
    %1660 = vmatprep.subr.mxu0 0.0
    %1661 = vmatpush1.msra.mxu0 0.0
    %1662 = vmatprep.subr.mxu0 0.0
    %1663 = vmatpush1.msra.mxu0 0.0
    %1664 = vmatprep.subr.mxu0 0.0
    %1665 = vmatpush1.msra.mxu0 0.0
    %1666 = vmatprep.subr.mxu0 0.0
    %1667 = vmatpush1.msra.mxu0 0.0
    %1668 = vmatprep.subr.mxu0 0.0
    %1669 = vmatpush1.msra.mxu0 0.0
    %1670 = vmatprep.subr.mxu0 0.0
    %1671 = vmatpush1.msra.mxu0 0.0
    %1672 = vmatprep.subr.mxu0 0.0
    %1673 = vmatpush1.msra.mxu0 0.0
    %1674 = vmatprep.subr.mxu0 0.0
    %1675 = vmatpush1.msra.mxu0 0.0
    %1676 = vmatprep.subr.mxu0 0.0
    %1677 = vmatpush1.msra.mxu0 0.0
    %1678 = vmatprep.subr.mxu0 0.0
    %1679 = vmatpush1.msra.mxu0 0.0
    %1680 = vmatprep.subr.mxu0 0.0
    %1681 = vmatpush1.msra.mxu0 0.0
    %1682 = vmatprep.subr.mxu0 0.0
    %1683 = vmatpush1.msra.mxu0 0.0
    %1684 = vmatprep.mubr.f32.mxu0 0.0
    %1685 = vmatmul.mubr.f32.gmra.mrb[0].mxu0 %v1618
    %v1686 = vpop.f32.mrb[0].mxu0
    %v1687 = vadd.f32 %v74, %v1686
    %v1688 = vpop.f32.mrb[0].mxu0
    %1689 = vdwg.mxu0
    %v1690 = vtanh.pop %v1687
    %v1692 = vsel %vm76, %v1690, 0
    %1694 = vmatprep.subr.mxu0 0.0
    %1695 = vmatpush1.msra.mxu0 %v59
    %1696 = vmatprep.subr.mxu0 0.0
    %1697 = vmatpush1.msra.mxu0 %v60
    %1698 = vmatprep.subr.mxu0 0.0
    %1699 = vmatpush1.msra.mxu0 %v61
    %1700 = vmatprep.subr.mxu0 0.0
    %1701 = vmatpush1.msra.mxu0 %v62
    %1702 = vmatprep.subr.mxu0 0.0
    %1703 = vmatpush1.msra.mxu0 0.0
    %1704 = vmatprep.subr.mxu0 0.0
    %1705 = vmatpush1.msra.mxu0 0.0
    %1706 = vmatprep.subr.mxu0 0.0
    %1707 = vmatpush1.msra.mxu0 0.0
    %1708 = vmatprep.subr.mxu0 0.0
    %1709 = vmatpush1.msra.mxu0 0.0
    %1710 = vmatprep.subr.mxu0 0.0
    %1711 = vmatpush1.msra.mxu0 0.0
    %1712 = vmatprep.subr.mxu0 0.0
    %1713 = vmatpush1.msra.mxu0 0.0
    %1714 = vmatprep.subr.mxu0 0.0
    %1715 = vmatpush1.msra.mxu0 0.0
    %1716 = vmatprep.subr.mxu0 0.0
    %1717 = vmatpush1.msra.mxu0 0.0
    %1718 = vmatprep.subr.mxu0 0.0
    %1719 = vmatpush1.msra.mxu0 0.0
    %1720 = vmatprep.subr.mxu0 0.0
    %1721 = vmatpush1.msra.mxu0 0.0
    %1722 = vmatprep.subr.mxu0 0.0
    %1723 = vmatpush1.msra.mxu0 0.0
    %1724 = vmatprep.subr.mxu0 0.0
    %1725 = vmatpush1.msra.mxu0 0.0
    %1726 = vmatprep.subr.mxu0 0.0
    %1727 = vmatpush1.msra.mxu0 0.0
    %1728 = vmatprep.subr.mxu0 0.0
    %1729 = vmatpush1.msra.mxu0 0.0
    %1730 = vmatprep.subr.mxu0 0.0
    %1731 = vmatpush1.msra.mxu0 0.0
    %1732 = vmatprep.subr.mxu0 0.0
    %1733 = vmatpush1.msra.mxu0 0.0
    %1734 = vmatprep.subr.mxu0 0.0
    %1735 = vmatpush1.msra.mxu0 0.0
    %1736 = vmatprep.subr.mxu0 0.0
    %1737 = vmatpush1.msra.mxu0 0.0
    %1738 = vmatprep.subr.mxu0 0.0
    %1739 = vmatpush1.msra.mxu0 0.0
    %1740 = vmatprep.subr.mxu0 0.0
    %1741 = vmatpush1.msra.mxu0 0.0
    %1742 = vmatprep.subr.mxu0 0.0
    %1743 = vmatpush1.msra.mxu0 0.0
    %1744 = vmatprep.subr.mxu0 0.0
    %1745 = vmatpush1.msra.mxu0 0.0
    %1746 = vmatprep.subr.mxu0 0.0
    %1747 = vmatpush1.msra.mxu0 0.0
    %1748 = vmatprep.subr.mxu0 0.0
    %1749 = vmatpush1.msra.mxu0 0.0
    %1750 = vmatprep.subr.mxu0 0.0
    %1751 = vmatpush1.msra.mxu0 0.0
    %1752 = vmatprep.subr.mxu0 0.0
    %1753 = vmatpush1.msra.mxu0 0.0
    %1754 = vmatprep.subr.mxu0 0.0
    %1755 = vmatpush1.msra.mxu0 0.0
    %1756 = vmatprep.subr.mxu0 0.0
    %1757 = vmatpush1.msra.mxu0 0.0
    %1758 = vmatprep.mubr.f32.mxu0 0.0
    %1759 = vmatmul.mubr.f32.gmra.mrb[0].mxu0 %v1692
    %v1760 = vpop.f32.mrb[0].mxu0
    %v1761 = vadd.f32 0.0, %v1760
    %v1762 = vpop.f32.mrb[0].mxu0
    %1763 = vdwg.mxu0
    %v1764 = vmul.f32 %v65, %v1761
    %v1765 = vadd.f32 %v1687, %v1764
    %v1766 = vtanh.pop %v1765
    %v1768 = vsel %vm76, %v1766, 0
    %1770 = vmatprep.subr.mxu0 0.0
    %1771 = vmatpush1.msra.mxu0 %v59
    %1772 = vmatprep.subr.mxu0 0.0
    %1773 = vmatpush1.msra.mxu0 %v60
    %1774 = vmatprep.subr.mxu0 0.0
    %1775 = vmatpush1.msra.mxu0 %v61
    %1776 = vmatprep.subr.mxu0 0.0
    %1777 = vmatpush1.msra.mxu0 %v62
    %1778 = vmatprep.subr.mxu0 0.0
    %1779 = vmatpush1.msra.mxu0 0.0
    %1780 = vmatprep.subr.mxu0 0.0
    %1781 = vmatpush1.msra.mxu0 0.0
    %1782 = vmatprep.subr.mxu0 0.0
    %1783 = vmatpush1.msra.mxu0 0.0
    %1784 = vmatprep.subr.mxu0 0.0
    %1785 = vmatpush1.msra.mxu0 0.0
    %1786 = vmatprep.subr.mxu0 0.0
    %1787 = vmatpush1.msra.mxu0 0.0
    %1788 = vmatprep.subr.mxu0 0.0
    %1789 = vmatpush1.msra.mxu0 0.0
    %1790 = vmatprep.subr.mxu0 0.0
    %1791 = vmatpush1.msra.mxu0 0.0
    %1792 = vmatprep.subr.mxu0 0.0
    %1793 = vmatpush1.msra.mxu0 0.0
    %1794 = vmatprep.subr.mxu0 0.0
    %1795 = vmatpush1.msra.mxu0 0.0
    %1796 = vmatprep.subr.mxu0 0.0
    %1797 = vmatpush1.msra.mxu0 0.0
    %1798 = vmatprep.subr.mxu0 0.0
    %1799 = vmatpush1.msra.mxu0 0.0
    %1800 = vmatprep.subr.mxu0 0.0
    %1801 = vmatpush1.msra.mxu0 0.0
    %1802 = vmatprep.subr.mxu0 0.0
    %1803 = vmatpush1.msra.mxu0 0.0
    %1804 = vmatprep.subr.mxu0 0.0
    %1805 = vmatpush1.msra.mxu0 0.0
    %1806 = vmatprep.subr.mxu0 0.0
    %1807 = vmatpush1.msra.mxu0 0.0
    %1808 = vmatprep.subr.mxu0 0.0
    %1809 = vmatpush1.msra.mxu0 0.0
    %1810 = vmatprep.subr.mxu0 0.0
    %1811 = vmatpush1.msra.mxu0 0.0
    %1812 = vmatprep.subr.mxu0 0.0
    %1813 = vmatpush1.msra.mxu0 0.0
    %1814 = vmatprep.subr.mxu0 0.0
    %1815 = vmatpush1.msra.mxu0 0.0
    %1816 = vmatprep.subr.mxu0 0.0
    %1817 = vmatpush1.msra.mxu0 0.0
    %1818 = vmatprep.subr.mxu0 0.0
    %1819 = vmatpush1.msra.mxu0 0.0
    %1820 = vmatprep.subr.mxu0 0.0
    %1821 = vmatpush1.msra.mxu0 0.0
    %1822 = vmatprep.subr.mxu0 0.0
    %1823 = vmatpush1.msra.mxu0 0.0
    %1824 = vmatprep.subr.mxu0 0.0
    %1825 = vmatpush1.msra.mxu0 0.0
    %1826 = vmatprep.subr.mxu0 0.0
    %1827 = vmatpush1.msra.mxu0 0.0
    %1828 = vmatprep.subr.mxu0 0.0
    %1829 = vmatpush1.msra.mxu0 0.0
    %1830 = vmatprep.subr.mxu0 0.0
    %1831 = vmatpush1.msra.mxu0 0.0
    %1832 = vmatprep.subr.mxu0 0.0
    %1833 = vmatpush1.msra.mxu0 0.0
    %1834 = vmatprep.mubr.f32.mxu0 0.0
    %1835 = vmatmul.mubr.f32.gmra.mrb[0].mxu0 %v1768
    %v1836 = vpop.f32.mrb[0].mxu0
    %v1837 = vadd.f32 0.0, %v1836
    %v1838 = vpop.f32.mrb[0].mxu0
    %1839 = vdwg.mxu0
    %v1840 = vmul.f32 %v65, %v1837
    %v1841 = vadd.f32 %v1687, %v1840
    %v1842 = vtanh.pop %v1841
    %v1843 = vadd.f32 %v1766, %v1842
    %v1844 = vadd.f32 %v1843, %v1843
    %v1845 = vadd.f32 %v1690, %v1844
    %v1847 = vsel %vm76, %v1842, 0
    %1849 = vmatprep.subr.mxu0 0.0
    %1850 = vmatpush1.msra.mxu0 %v59
    %1851 = vmatprep.subr.mxu0 0.0
    %1852 = vmatpush1.msra.mxu0 %v60
    %1853 = vmatprep.subr.mxu0 0.0
    %1854 = vmatpush1.msra.mxu0 %v61
    %1855 = vmatprep.subr.mxu0 0.0
    %1856 = vmatpush1.msra.mxu0 %v62
    %1857 = vmatprep.subr.mxu0 0.0
    %1858 = vmatpush1.msra.mxu0 0.0
    %1859 = vmatprep.subr.mxu0 0.0
    %1860 = vmatpush1.msra.mxu0 0.0
    %1861 = vmatprep.subr.mxu0 0.0
    %1862 = vmatpush1.msra.mxu0 0.0
    %1863 = vmatprep.subr.mxu0 0.0
    %1864 = vmatpush1.msra.mxu0 0.0
    %1865 = vmatprep.subr.mxu0 0.0
    %1866 = vmatpush1.msra.mxu0 0.0
    %1867 = vmatprep.subr.mxu0 0.0
    %1868 = vmatpush1.msra.mxu0 0.0
    %1869 = vmatprep.subr.mxu0 0.0
    %1870 = vmatpush1.msra.mxu0 0.0
    %1871 = vmatprep.subr.mxu0 0.0
    %1872 = vmatpush1.msra.mxu0 0.0
    %1873 = vmatprep.subr.mxu0 0.0
    %1874 = vmatpush1.msra.mxu0 0.0
    %1875 = vmatprep.subr.mxu0 0.0
    %1876 = vmatpush1.msra.mxu0 0.0
    %1877 = vmatprep.subr.mxu0 0.0
    %1878 = vmatpush1.msra.mxu0 0.0
    %1879 = vmatprep.subr.mxu0 0.0
    %1880 = vmatpush1.msra.mxu0 0.0
    %1881 = vmatprep.subr.mxu0 0.0
    %1882 = vmatpush1.msra.mxu0 0.0
    %1883 = vmatprep.subr.mxu0 0.0
    %1884 = vmatpush1.msra.mxu0 0.0
    %1885 = vmatprep.subr.mxu0 0.0
    %1886 = vmatpush1.msra.mxu0 0.0
    %1887 = vmatprep.subr.mxu0 0.0
    %1888 = vmatpush1.msra.mxu0 0.0
    %1889 = vmatprep.subr.mxu0 0.0
    %1890 = vmatpush1.msra.mxu0 0.0
    %1891 = vmatprep.subr.mxu0 0.0
    %1892 = vmatpush1.msra.mxu0 0.0
    %1893 = vmatprep.subr.mxu0 0.0
    %1894 = vmatpush1.msra.mxu0 0.0
    %1895 = vmatprep.subr.mxu0 0.0
    %1896 = vmatpush1.msra.mxu0 0.0
    %1897 = vmatprep.subr.mxu0 0.0
    %1898 = vmatpush1.msra.mxu0 0.0
    %1899 = vmatprep.subr.mxu0 0.0
    %1900 = vmatpush1.msra.mxu0 0.0
    %1901 = vmatprep.subr.mxu0 0.0
    %1902 = vmatpush1.msra.mxu0 0.0
    %1903 = vmatprep.subr.mxu0 0.0
    %1904 = vmatpush1.msra.mxu0 0.0
    %1905 = vmatprep.subr.mxu0 0.0
    %1906 = vmatpush1.msra.mxu0 0.0
    %1907 = vmatprep.subr.mxu0 0.0
    %1908 = vmatpush1.msra.mxu0 0.0
    %1909 = vmatprep.subr.mxu0 0.0
    %1910 = vmatpush1.msra.mxu0 0.0
    %1911 = vmatprep.subr.mxu0 0.0
    %1912 = vmatpush1.msra.mxu0 0.0
    %1913 = vmatprep.mubr.f32.mxu0 0.0
    %1914 = vmatmul.mubr.f32.gmra.mrb[0].mxu0 %v1847
    %v1915 = vpop.f32.mrb[0].mxu0
    %v1916 = vadd.f32 0.0, %v1915
    %v1917 = vpop.f32.mrb[0].mxu0
    %1918 = vdwg.mxu0
    %v1919 = vmul.f32 %v66, %v1916
    %v1920 = vadd.f32 %v1687, %v1919
    %v1921 = vtanh.pop %v1920
    %v1922 = vadd.f32 %v1845, %v1921
    %v1923 = vmul.f32 %v68, %v1922
    %v1924 = vadd.f32 %v1616, %v1923
    %v1926 = vsel %vm76, %v1924, 0
    %1928 = vmatprep.subr.mxu0 0.0
    %1929 = vmatpush1.msra.mxu0 %v59
    %1930 = vmatprep.subr.mxu0 0.0
    %1931 = vmatpush1.msra.mxu0 %v60
    %1932 = vmatprep.subr.mxu0 0.0
    %1933 = vmatpush1.msra.mxu0 %v61
    %1934 = vmatprep.subr.mxu0 0.0
    %1935 = vmatpush1.msra.mxu0 %v62
    %1936 = vmatprep.subr.mxu0 0.0
    %1937 = vmatpush1.msra.mxu0 0.0
    %1938 = vmatprep.subr.mxu0 0.0
    %1939 = vmatpush1.msra.mxu0 0.0
    %1940 = vmatprep.subr.mxu0 0.0
    %1941 = vmatpush1.msra.mxu0 0.0
    %1942 = vmatprep.subr.mxu0 0.0
    %1943 = vmatpush1.msra.mxu0 0.0
    %1944 = vmatprep.subr.mxu0 0.0
    %1945 = vmatpush1.msra.mxu0 0.0
    %1946 = vmatprep.subr.mxu0 0.0
    %1947 = vmatpush1.msra.mxu0 0.0
    %1948 = vmatprep.subr.mxu0 0.0
    %1949 = vmatpush1.msra.mxu0 0.0
    %1950 = vmatprep.subr.mxu0 0.0
    %1951 = vmatpush1.msra.mxu0 0.0
    %1952 = vmatprep.subr.mxu0 0.0
    %1953 = vmatpush1.msra.mxu0 0.0
    %1954 = vmatprep.subr.mxu0 0.0
    %1955 = vmatpush1.msra.mxu0 0.0
    %1956 = vmatprep.subr.mxu0 0.0
    %1957 = vmatpush1.msra.mxu0 0.0
    %1958 = vmatprep.subr.mxu0 0.0
    %1959 = vmatpush1.msra.mxu0 0.0
    %1960 = vmatprep.subr.mxu0 0.0
    %1961 = vmatpush1.msra.mxu0 0.0
    %1962 = vmatprep.subr.mxu0 0.0
    %1963 = vmatpush1.msra.mxu0 0.0
    %1964 = vmatprep.subr.mxu0 0.0
    %1965 = vmatpush1.msra.mxu0 0.0
    %1966 = vmatprep.subr.mxu0 0.0
    %1967 = vmatpush1.msra.mxu0 0.0
    %1968 = vmatprep.subr.mxu0 0.0
    %1969 = vmatpush1.msra.mxu0 0.0
    %1970 = vmatprep.subr.mxu0 0.0
    %1971 = vmatpush1.msra.mxu0 0.0
    %1972 = vmatprep.subr.mxu0 0.0
    %1973 = vmatpush1.msra.mxu0 0.0
    %1974 = vmatprep.subr.mxu0 0.0
    %1975 = vmatpush1.msra.mxu0 0.0
    %1976 = vmatprep.subr.mxu0 0.0
    %1977 = vmatpush1.msra.mxu0 0.0
    %1978 = vmatprep.subr.mxu0 0.0
    %1979 = vmatpush1.msra.mxu0 0.0
    %1980 = vmatprep.subr.mxu0 0.0
    %1981 = vmatpush1.msra.mxu0 0.0
    %1982 = vmatprep.subr.mxu0 0.0
    %1983 = vmatpush1.msra.mxu0 0.0
    %1984 = vmatprep.subr.mxu0 0.0
    %1985 = vmatpush1.msra.mxu0 0.0
    %1986 = vmatprep.subr.mxu0 0.0
    %1987 = vmatpush1.msra.mxu0 0.0
    %1988 = vmatprep.subr.mxu0 0.0
    %1989 = vmatpush1.msra.mxu0 0.0
    %1990 = vmatprep.subr.mxu0 0.0
    %1991 = vmatpush1.msra.mxu0 0.0
    %1992 = vmatprep.mubr.f32.mxu0 0.0
    %1993 = vmatmul.mubr.f32.gmra.mrb[0].mxu0 %v1926
    %v1994 = vpop.f32.mrb[0].mxu0
    %v1995 = vadd.f32 %v74, %v1994
    %v1996 = vpop.f32.mrb[0].mxu0
    %1997 = vdwg.mxu0
    %v1998 = vtanh.pop %v1995
    %v2000 = vsel %vm76, %v1998, 0
    %2002 = vmatprep.subr.mxu0 0.0
    %2003 = vmatpush1.msra.mxu0 %v59
    %2004 = vmatprep.subr.mxu0 0.0
    %2005 = vmatpush1.msra.mxu0 %v60
    %2006 = vmatprep.subr.mxu0 0.0
    %2007 = vmatpush1.msra.mxu0 %v61
    %2008 = vmatprep.subr.mxu0 0.0
    %2009 = vmatpush1.msra.mxu0 %v62
    %2010 = vmatprep.subr.mxu0 0.0
    %2011 = vmatpush1.msra.mxu0 0.0
    %2012 = vmatprep.subr.mxu0 0.0
    %2013 = vmatpush1.msra.mxu0 0.0
    %2014 = vmatprep.subr.mxu0 0.0
    %2015 = vmatpush1.msra.mxu0 0.0
    %2016 = vmatprep.subr.mxu0 0.0
    %2017 = vmatpush1.msra.mxu0 0.0
    %2018 = vmatprep.subr.mxu0 0.0
    %2019 = vmatpush1.msra.mxu0 0.0
    %2020 = vmatprep.subr.mxu0 0.0
    %2021 = vmatpush1.msra.mxu0 0.0
    %2022 = vmatprep.subr.mxu0 0.0
    %2023 = vmatpush1.msra.mxu0 0.0
    %2024 = vmatprep.subr.mxu0 0.0
    %2025 = vmatpush1.msra.mxu0 0.0
    %2026 = vmatprep.subr.mxu0 0.0
    %2027 = vmatpush1.msra.mxu0 0.0
    %2028 = vmatprep.subr.mxu0 0.0
    %2029 = vmatpush1.msra.mxu0 0.0
    %2030 = vmatprep.subr.mxu0 0.0
    %2031 = vmatpush1.msra.mxu0 0.0
    %2032 = vmatprep.subr.mxu0 0.0
    %2033 = vmatpush1.msra.mxu0 0.0
    %2034 = vmatprep.subr.mxu0 0.0
    %2035 = vmatpush1.msra.mxu0 0.0
    %2036 = vmatprep.subr.mxu0 0.0
    %2037 = vmatpush1.msra.mxu0 0.0
    %2038 = vmatprep.subr.mxu0 0.0
    %2039 = vmatpush1.msra.mxu0 0.0
    %2040 = vmatprep.subr.mxu0 0.0
    %2041 = vmatpush1.msra.mxu0 0.0
    %2042 = vmatprep.subr.mxu0 0.0
    %2043 = vmatpush1.msra.mxu0 0.0
    %2044 = vmatprep.subr.mxu0 0.0
    %2045 = vmatpush1.msra.mxu0 0.0
    %2046 = vmatprep.subr.mxu0 0.0
    %2047 = vmatpush1.msra.mxu0 0.0
    %2048 = vmatprep.subr.mxu0 0.0
    %2049 = vmatpush1.msra.mxu0 0.0
    %2050 = vmatprep.subr.mxu0 0.0
    %2051 = vmatpush1.msra.mxu0 0.0
    %2052 = vmatprep.subr.mxu0 0.0
    %2053 = vmatpush1.msra.mxu0 0.0
    %2054 = vmatprep.subr.mxu0 0.0
    %2055 = vmatpush1.msra.mxu0 0.0
    %2056 = vmatprep.subr.mxu0 0.0
    %2057 = vmatpush1.msra.mxu0 0.0
    %2058 = vmatprep.subr.mxu0 0.0
    %2059 = vmatpush1.msra.mxu0 0.0
    %2060 = vmatprep.subr.mxu0 0.0
    %2061 = vmatpush1.msra.mxu0 0.0
    %2062 = vmatprep.subr.mxu0 0.0
    %2063 = vmatpush1.msra.mxu0 0.0
    %2064 = vmatprep.subr.mxu0 0.0
    %2065 = vmatpush1.msra.mxu0 0.0
    %2066 = vmatprep.mubr.f32.mxu0 0.0
    %2067 = vmatmul.mubr.f32.gmra.mrb[0].mxu0 %v2000
    %v2068 = vpop.f32.mrb[0].mxu0
    %v2069 = vadd.f32 0.0, %v2068
    %v2070 = vpop.f32.mrb[0].mxu0
    %2071 = vdwg.mxu0
    %v2072 = vmul.f32 %v65, %v2069
    %v2073 = vadd.f32 %v1995, %v2072
    %v2074 = vtanh.pop %v2073
    %v2076 = vsel %vm76, %v2074, 0
    %2078 = vmatprep.subr.mxu0 0.0
    %2079 = vmatpush1.msra.mxu0 %v59
    %2080 = vmatprep.subr.mxu0 0.0
    %2081 = vmatpush1.msra.mxu0 %v60
    %2082 = vmatprep.subr.mxu0 0.0
    %2083 = vmatpush1.msra.mxu0 %v61
    %2084 = vmatprep.subr.mxu0 0.0
    %2085 = vmatpush1.msra.mxu0 %v62
    %2086 = vmatprep.subr.mxu0 0.0
    %2087 = vmatpush1.msra.mxu0 0.0
    %2088 = vmatprep.subr.mxu0 0.0
    %2089 = vmatpush1.msra.mxu0 0.0
    %2090 = vmatprep.subr.mxu0 0.0
    %2091 = vmatpush1.msra.mxu0 0.0
    %2092 = vmatprep.subr.mxu0 0.0
    %2093 = vmatpush1.msra.mxu0 0.0
    %2094 = vmatprep.subr.mxu0 0.0
    %2095 = vmatpush1.msra.mxu0 0.0
    %2096 = vmatprep.subr.mxu0 0.0
    %2097 = vmatpush1.msra.mxu0 0.0
    %2098 = vmatprep.subr.mxu0 0.0
    %2099 = vmatpush1.msra.mxu0 0.0
    %2100 = vmatprep.subr.mxu0 0.0
    %2101 = vmatpush1.msra.mxu0 0.0
    %2102 = vmatprep.subr.mxu0 0.0
    %2103 = vmatpush1.msra.mxu0 0.0
    %2104 = vmatprep.subr.mxu0 0.0
    %2105 = vmatpush1.msra.mxu0 0.0
    %2106 = vmatprep.subr.mxu0 0.0
    %2107 = vmatpush1.msra.mxu0 0.0
    %2108 = vmatprep.subr.mxu0 0.0
    %2109 = vmatpush1.msra.mxu0 0.0
    %2110 = vmatprep.subr.mxu0 0.0
    %2111 = vmatpush1.msra.mxu0 0.0
    %2112 = vmatprep.subr.mxu0 0.0
    %2113 = vmatpush1.msra.mxu0 0.0
    %2114 = vmatprep.subr.mxu0 0.0
    %2115 = vmatpush1.msra.mxu0 0.0
    %2116 = vmatprep.subr.mxu0 0.0
    %2117 = vmatpush1.msra.mxu0 0.0
    %2118 = vmatprep.subr.mxu0 0.0
    %2119 = vmatpush1.msra.mxu0 0.0
    %2120 = vmatprep.subr.mxu0 0.0
    %2121 = vmatpush1.msra.mxu0 0.0
    %2122 = vmatprep.subr.mxu0 0.0
    %2123 = vmatpush1.msra.mxu0 0.0
    %2124 = vmatprep.subr.mxu0 0.0
    %2125 = vmatpush1.msra.mxu0 0.0
    %2126 = vmatprep.subr.mxu0 0.0
    %2127 = vmatpush1.msra.mxu0 0.0
    %2128 = vmatprep.subr.mxu0 0.0
    %2129 = vmatpush1.msra.mxu0 0.0
    %2130 = vmatprep.subr.mxu0 0.0
    %2131 = vmatpush1.msra.mxu0 0.0
    %2132 = vmatprep.subr.mxu0 0.0
    %2133 = vmatpush1.msra.mxu0 0.0
    %2134 = vmatprep.subr.mxu0 0.0
    %2135 = vmatpush1.msra.mxu0 0.0
    %2136 = vmatprep.subr.mxu0 0.0
    %2137 = vmatpush1.msra.mxu0 0.0
    %2138 = vmatprep.subr.mxu0 0.0
    %2139 = vmatpush1.msra.mxu0 0.0
    %2140 = vmatprep.subr.mxu0 0.0
    %2141 = vmatpush1.msra.mxu0 0.0
    %2142 = vmatprep.mubr.f32.mxu0 0.0
    %2143 = vmatmul.mubr.f32.gmra.mrb[0].mxu0 %v2076
    %v2144 = vpop.f32.mrb[0].mxu0
    %v2145 = vadd.f32 0.0, %v2144
    %v2146 = vpop.f32.mrb[0].mxu0
    %2147 = vdwg.mxu0
    %v2148 = vmul.f32 %v65, %v2145
    %v2149 = vadd.f32 %v1995, %v2148
    %v2150 = vtanh.pop %v2149
    %v2151 = vadd.f32 %v2074, %v2150
    %v2152 = vadd.f32 %v2151, %v2151
    %v2153 = vadd.f32 %v1998, %v2152
    %v2155 = vsel %vm76, %v2150, 0
    %2157 = vmatprep.subr.mxu0 0.0
    %2158 = vmatpush1.msra.mxu0 %v59
    %2159 = vmatprep.subr.mxu0 0.0
    %2160 = vmatpush1.msra.mxu0 %v60
    %2161 = vmatprep.subr.mxu0 0.0
    %2162 = vmatpush1.msra.mxu0 %v61
    %2163 = vmatprep.subr.mxu0 0.0
    %2164 = vmatpush1.msra.mxu0 %v62
    %2165 = vmatprep.subr.mxu0 0.0
    %2166 = vmatpush1.msra.mxu0 0.0
    %2167 = vmatprep.subr.mxu0 0.0
    %2168 = vmatpush1.msra.mxu0 0.0
    %2169 = vmatprep.subr.mxu0 0.0
    %2170 = vmatpush1.msra.mxu0 0.0
    %2171 = vmatprep.subr.mxu0 0.0
    %2172 = vmatpush1.msra.mxu0 0.0
    %2173 = vmatprep.subr.mxu0 0.0
    %2174 = vmatpush1.msra.mxu0 0.0
    %2175 = vmatprep.subr.mxu0 0.0
    %2176 = vmatpush1.msra.mxu0 0.0
    %2177 = vmatprep.subr.mxu0 0.0
    %2178 = vmatpush1.msra.mxu0 0.0
    %2179 = vmatprep.subr.mxu0 0.0
    %2180 = vmatpush1.msra.mxu0 0.0
    %2181 = vmatprep.subr.mxu0 0.0
    %2182 = vmatpush1.msra.mxu0 0.0
    %2183 = vmatprep.subr.mxu0 0.0
    %2184 = vmatpush1.msra.mxu0 0.0
    %2185 = vmatprep.subr.mxu0 0.0
    %2186 = vmatpush1.msra.mxu0 0.0
    %2187 = vmatprep.subr.mxu0 0.0
    %2188 = vmatpush1.msra.mxu0 0.0
    %2189 = vmatprep.subr.mxu0 0.0
    %2190 = vmatpush1.msra.mxu0 0.0
    %2191 = vmatprep.subr.mxu0 0.0
    %2192 = vmatpush1.msra.mxu0 0.0
    %2193 = vmatprep.subr.mxu0 0.0
    %2194 = vmatpush1.msra.mxu0 0.0
    %2195 = vmatprep.subr.mxu0 0.0
    %2196 = vmatpush1.msra.mxu0 0.0
    %2197 = vmatprep.subr.mxu0 0.0
    %2198 = vmatpush1.msra.mxu0 0.0
    %2199 = vmatprep.subr.mxu0 0.0
    %2200 = vmatpush1.msra.mxu0 0.0
    %2201 = vmatprep.subr.mxu0 0.0
    %2202 = vmatpush1.msra.mxu0 0.0
    %2203 = vmatprep.subr.mxu0 0.0
    %2204 = vmatpush1.msra.mxu0 0.0
    %2205 = vmatprep.subr.mxu0 0.0
    %2206 = vmatpush1.msra.mxu0 0.0
    %2207 = vmatprep.subr.mxu0 0.0
    %2208 = vmatpush1.msra.mxu0 0.0
    %2209 = vmatprep.subr.mxu0 0.0
    %2210 = vmatpush1.msra.mxu0 0.0
    %2211 = vmatprep.subr.mxu0 0.0
    %2212 = vmatpush1.msra.mxu0 0.0
    %2213 = vmatprep.subr.mxu0 0.0
    %2214 = vmatpush1.msra.mxu0 0.0
    %2215 = vmatprep.subr.mxu0 0.0
    %2216 = vmatpush1.msra.mxu0 0.0
    %2217 = vmatprep.subr.mxu0 0.0
    %2218 = vmatpush1.msra.mxu0 0.0
    %2219 = vmatprep.subr.mxu0 0.0
    %2220 = vmatpush1.msra.mxu0 0.0
    %2221 = vmatprep.mubr.f32.mxu0 0.0
    %2222 = vmatmul.mubr.f32.gmra.mrb[0].mxu0 %v2155
    %v2223 = vpop.f32.mrb[0].mxu0
    %v2224 = vadd.f32 0.0, %v2223
    %v2225 = vpop.f32.mrb[0].mxu0
    %2226 = vdwg.mxu0
    %v2227 = vmul.f32 %v66, %v2224
    %v2228 = vadd.f32 %v1995, %v2227
    %v2229 = vtanh.pop %v2228
    %v2230 = vadd.f32 %v2153, %v2229
    %v2231 = vmul.f32 %v68, %v2230
    %v2232 = vadd.f32 %v1924, %v2231
    %v2234 = vsel %vm76, %v2232, 0
    %2236 = vmatprep.subr.mxu0 0.0
    %2237 = vmatpush1.msra.mxu0 %v59
    %2238 = vmatprep.subr.mxu0 0.0
    %2239 = vmatpush1.msra.mxu0 %v60
    %2240 = vmatprep.subr.mxu0 0.0
    %2241 = vmatpush1.msra.mxu0 %v61
    %2242 = vmatprep.subr.mxu0 0.0
    %2243 = vmatpush1.msra.mxu0 %v62
    %2244 = vmatprep.subr.mxu0 0.0
    %2245 = vmatpush1.msra.mxu0 0.0
    %2246 = vmatprep.subr.mxu0 0.0
    %2247 = vmatpush1.msra.mxu0 0.0
    %2248 = vmatprep.subr.mxu0 0.0
    %2249 = vmatpush1.msra.mxu0 0.0
    %2250 = vmatprep.subr.mxu0 0.0
    %2251 = vmatpush1.msra.mxu0 0.0
    %2252 = vmatprep.subr.mxu0 0.0
    %2253 = vmatpush1.msra.mxu0 0.0
    %2254 = vmatprep.subr.mxu0 0.0
    %2255 = vmatpush1.msra.mxu0 0.0
    %2256 = vmatprep.subr.mxu0 0.0
    %2257 = vmatpush1.msra.mxu0 0.0
    %2258 = vmatprep.subr.mxu0 0.0
    %2259 = vmatpush1.msra.mxu0 0.0
    %2260 = vmatprep.subr.mxu0 0.0
    %2261 = vmatpush1.msra.mxu0 0.0
    %2262 = vmatprep.subr.mxu0 0.0
    %2263 = vmatpush1.msra.mxu0 0.0
    %2264 = vmatprep.subr.mxu0 0.0
    %2265 = vmatpush1.msra.mxu0 0.0
    %2266 = vmatprep.subr.mxu0 0.0
    %2267 = vmatpush1.msra.mxu0 0.0
    %2268 = vmatprep.subr.mxu0 0.0
    %2269 = vmatpush1.msra.mxu0 0.0
    %2270 = vmatprep.subr.mxu0 0.0
    %2271 = vmatpush1.msra.mxu0 0.0
    %2272 = vmatprep.subr.mxu0 0.0
    %2273 = vmatpush1.msra.mxu0 0.0
    %2274 = vmatprep.subr.mxu0 0.0
    %2275 = vmatpush1.msra.mxu0 0.0
    %2276 = vmatprep.subr.mxu0 0.0
    %2277 = vmatpush1.msra.mxu0 0.0
    %2278 = vmatprep.subr.mxu0 0.0
    %2279 = vmatpush1.msra.mxu0 0.0
    %2280 = vmatprep.subr.mxu0 0.0
    %2281 = vmatpush1.msra.mxu0 0.0
    %2282 = vmatprep.subr.mxu0 0.0
    %2283 = vmatpush1.msra.mxu0 0.0
    %2284 = vmatprep.subr.mxu0 0.0
    %2285 = vmatpush1.msra.mxu0 0.0
    %2286 = vmatprep.subr.mxu0 0.0
    %2287 = vmatpush1.msra.mxu0 0.0
    %2288 = vmatprep.subr.mxu0 0.0
    %2289 = vmatpush1.msra.mxu0 0.0
    %2290 = vmatprep.subr.mxu0 0.0
    %2291 = vmatpush1.msra.mxu0 0.0
    %2292 = vmatprep.subr.mxu0 0.0
    %2293 = vmatpush1.msra.mxu0 0.0
    %2294 = vmatprep.subr.mxu0 0.0
    %2295 = vmatpush1.msra.mxu0 0.0
    %2296 = vmatprep.subr.mxu0 0.0
    %2297 = vmatpush1.msra.mxu0 0.0
    %2298 = vmatprep.subr.mxu0 0.0
    %2299 = vmatpush1.msra.mxu0 0.0
    %2300 = vmatprep.mubr.f32.mxu0 0.0
    %2301 = vmatmul.mubr.f32.gmra.mrb[0].mxu0 %v2234
    %v2302 = vpop.f32.mrb[0].mxu0
    %v2303 = vadd.f32 %v74, %v2302
    %v2304 = vpop.f32.mrb[0].mxu0
    %2305 = vdwg.mxu0
    %v2306 = vtanh.pop %v2303
    %v2308 = vsel %vm76, %v2306, 0
    %2310 = vmatprep.subr.mxu0 0.0
    %2311 = vmatpush1.msra.mxu0 %v59
    %2312 = vmatprep.subr.mxu0 0.0
    %2313 = vmatpush1.msra.mxu0 %v60
    %2314 = vmatprep.subr.mxu0 0.0
    %2315 = vmatpush1.msra.mxu0 %v61
    %2316 = vmatprep.subr.mxu0 0.0
    %2317 = vmatpush1.msra.mxu0 %v62
    %2318 = vmatprep.subr.mxu0 0.0
    %2319 = vmatpush1.msra.mxu0 0.0
    %2320 = vmatprep.subr.mxu0 0.0
    %2321 = vmatpush1.msra.mxu0 0.0
    %2322 = vmatprep.subr.mxu0 0.0
    %2323 = vmatpush1.msra.mxu0 0.0
    %2324 = vmatprep.subr.mxu0 0.0
    %2325 = vmatpush1.msra.mxu0 0.0
    %2326 = vmatprep.subr.mxu0 0.0
    %2327 = vmatpush1.msra.mxu0 0.0
    %2328 = vmatprep.subr.mxu0 0.0
    %2329 = vmatpush1.msra.mxu0 0.0
    %2330 = vmatprep.subr.mxu0 0.0
    %2331 = vmatpush1.msra.mxu0 0.0
    %2332 = vmatprep.subr.mxu0 0.0
    %2333 = vmatpush1.msra.mxu0 0.0
    %2334 = vmatprep.subr.mxu0 0.0
    %2335 = vmatpush1.msra.mxu0 0.0
    %2336 = vmatprep.subr.mxu0 0.0
    %2337 = vmatpush1.msra.mxu0 0.0
    %2338 = vmatprep.subr.mxu0 0.0
    %2339 = vmatpush1.msra.mxu0 0.0
    %2340 = vmatprep.subr.mxu0 0.0
    %2341 = vmatpush1.msra.mxu0 0.0
    %2342 = vmatprep.subr.mxu0 0.0
    %2343 = vmatpush1.msra.mxu0 0.0
    %2344 = vmatprep.subr.mxu0 0.0
    %2345 = vmatpush1.msra.mxu0 0.0
    %2346 = vmatprep.subr.mxu0 0.0
    %2347 = vmatpush1.msra.mxu0 0.0
    %2348 = vmatprep.subr.mxu0 0.0
    %2349 = vmatpush1.msra.mxu0 0.0
    %2350 = vmatprep.subr.mxu0 0.0
    %2351 = vmatpush1.msra.mxu0 0.0
    %2352 = vmatprep.subr.mxu0 0.0
    %2353 = vmatpush1.msra.mxu0 0.0
    %2354 = vmatprep.subr.mxu0 0.0
    %2355 = vmatpush1.msra.mxu0 0.0
    %2356 = vmatprep.subr.mxu0 0.0
    %2357 = vmatpush1.msra.mxu0 0.0
    %2358 = vmatprep.subr.mxu0 0.0
    %2359 = vmatpush1.msra.mxu0 0.0
    %2360 = vmatprep.subr.mxu0 0.0
    %2361 = vmatpush1.msra.mxu0 0.0
    %2362 = vmatprep.subr.mxu0 0.0
    %2363 = vmatpush1.msra.mxu0 0.0
    %2364 = vmatprep.subr.mxu0 0.0
    %2365 = vmatpush1.msra.mxu0 0.0
    %2366 = vmatprep.subr.mxu0 0.0
    %2367 = vmatpush1.msra.mxu0 0.0
    %2368 = vmatprep.subr.mxu0 0.0
    %2369 = vmatpush1.msra.mxu0 0.0
    %2370 = vmatprep.subr.mxu0 0.0
    %2371 = vmatpush1.msra.mxu0 0.0
    %2372 = vmatprep.subr.mxu0 0.0
    %2373 = vmatpush1.msra.mxu0 0.0
    %2374 = vmatprep.mubr.f32.mxu0 0.0
    %2375 = vmatmul.mubr.f32.gmra.mrb[0].mxu0 %v2308
    %v2376 = vpop.f32.mrb[0].mxu0
    %v2377 = vadd.f32 0.0, %v2376
    %v2378 = vpop.f32.mrb[0].mxu0
    %2379 = vdwg.mxu0
    %v2380 = vmul.f32 %v65, %v2377
    %v2381 = vadd.f32 %v2303, %v2380
    %v2382 = vtanh.pop %v2381
    %v2384 = vsel %vm76, %v2382, 0
    %2386 = vmatprep.subr.mxu0 0.0
    %2387 = vmatpush1.msra.mxu0 %v59
    %2388 = vmatprep.subr.mxu0 0.0
    %2389 = vmatpush1.msra.mxu0 %v60
    %2390 = vmatprep.subr.mxu0 0.0
    %2391 = vmatpush1.msra.mxu0 %v61
    %2392 = vmatprep.subr.mxu0 0.0
    %2393 = vmatpush1.msra.mxu0 %v62
    %2394 = vmatprep.subr.mxu0 0.0
    %2395 = vmatpush1.msra.mxu0 0.0
    %2396 = vmatprep.subr.mxu0 0.0
    %2397 = vmatpush1.msra.mxu0 0.0
    %2398 = vmatprep.subr.mxu0 0.0
    %2399 = vmatpush1.msra.mxu0 0.0
    %2400 = vmatprep.subr.mxu0 0.0
    %2401 = vmatpush1.msra.mxu0 0.0
    %2402 = vmatprep.subr.mxu0 0.0
    %2403 = vmatpush1.msra.mxu0 0.0
    %2404 = vmatprep.subr.mxu0 0.0
    %2405 = vmatpush1.msra.mxu0 0.0
    %2406 = vmatprep.subr.mxu0 0.0
    %2407 = vmatpush1.msra.mxu0 0.0
    %2408 = vmatprep.subr.mxu0 0.0
    %2409 = vmatpush1.msra.mxu0 0.0
    %2410 = vmatprep.subr.mxu0 0.0
    %2411 = vmatpush1.msra.mxu0 0.0
    %2412 = vmatprep.subr.mxu0 0.0
    %2413 = vmatpush1.msra.mxu0 0.0
    %2414 = vmatprep.subr.mxu0 0.0
    %2415 = vmatpush1.msra.mxu0 0.0
    %2416 = vmatprep.subr.mxu0 0.0
    %2417 = vmatpush1.msra.mxu0 0.0
    %2418 = vmatprep.subr.mxu0 0.0
    %2419 = vmatpush1.msra.mxu0 0.0
    %2420 = vmatprep.subr.mxu0 0.0
    %2421 = vmatpush1.msra.mxu0 0.0
    %2422 = vmatprep.subr.mxu0 0.0
    %2423 = vmatpush1.msra.mxu0 0.0
    %2424 = vmatprep.subr.mxu0 0.0
    %2425 = vmatpush1.msra.mxu0 0.0
    %2426 = vmatprep.subr.mxu0 0.0
    %2427 = vmatpush1.msra.mxu0 0.0
    %2428 = vmatprep.subr.mxu0 0.0
    %2429 = vmatpush1.msra.mxu0 0.0
    %2430 = vmatprep.subr.mxu0 0.0
    %2431 = vmatpush1.msra.mxu0 0.0
    %2432 = vmatprep.subr.mxu0 0.0
    %2433 = vmatpush1.msra.mxu0 0.0
    %2434 = vmatprep.subr.mxu0 0.0
    %2435 = vmatpush1.msra.mxu0 0.0
    %2436 = vmatprep.subr.mxu0 0.0
    %2437 = vmatpush1.msra.mxu0 0.0
    %2438 = vmatprep.subr.mxu0 0.0
    %2439 = vmatpush1.msra.mxu0 0.0
    %2440 = vmatprep.subr.mxu0 0.0
    %2441 = vmatpush1.msra.mxu0 0.0
    %2442 = vmatprep.subr.mxu0 0.0
    %2443 = vmatpush1.msra.mxu0 0.0
    %2444 = vmatprep.subr.mxu0 0.0
    %2445 = vmatpush1.msra.mxu0 0.0
    %2446 = vmatprep.subr.mxu0 0.0
    %2447 = vmatpush1.msra.mxu0 0.0
    %2448 = vmatprep.subr.mxu0 0.0
    %2449 = vmatpush1.msra.mxu0 0.0
    %2450 = vmatprep.mubr.f32.mxu0 0.0
    %2451 = vmatmul.mubr.f32.gmra.mrb[0].mxu0 %v2384
    %v2452 = vpop.f32.mrb[0].mxu0
    %v2453 = vadd.f32 0.0, %v2452
    %v2454 = vpop.f32.mrb[0].mxu0
    %2455 = vdwg.mxu0
    %v2456 = vmul.f32 %v65, %v2453
    %v2457 = vadd.f32 %v2303, %v2456
    %v2458 = vtanh.pop %v2457
    %v2459 = vadd.f32 %v2382, %v2458
    %v2460 = vadd.f32 %v2459, %v2459
    %v2461 = vadd.f32 %v2306, %v2460
    %v2463 = vsel %vm76, %v2458, 0
    %2465 = vmatprep.subr.mxu0 0.0
    %2466 = vmatpush1.msra.mxu0 %v59
    %2467 = vmatprep.subr.mxu0 0.0
    %2468 = vmatpush1.msra.mxu0 %v60
    %2469 = vmatprep.subr.mxu0 0.0
    %2470 = vmatpush1.msra.mxu0 %v61
    %2471 = vmatprep.subr.mxu0 0.0
    %2472 = vmatpush1.msra.mxu0 %v62
    %2473 = vmatprep.subr.mxu0 0.0
    %2474 = vmatpush1.msra.mxu0 0.0
    %2475 = vmatprep.subr.mxu0 0.0
    %2476 = vmatpush1.msra.mxu0 0.0
    %2477 = vmatprep.subr.mxu0 0.0
    %2478 = vmatpush1.msra.mxu0 0.0
    %2479 = vmatprep.subr.mxu0 0.0
    %2480 = vmatpush1.msra.mxu0 0.0
    %2481 = vmatprep.subr.mxu0 0.0
    %2482 = vmatpush1.msra.mxu0 0.0
    %2483 = vmatprep.subr.mxu0 0.0
    %2484 = vmatpush1.msra.mxu0 0.0
    %2485 = vmatprep.subr.mxu0 0.0
    %2486 = vmatpush1.msra.mxu0 0.0
    %2487 = vmatprep.subr.mxu0 0.0
    %2488 = vmatpush1.msra.mxu0 0.0
    %2489 = vmatprep.subr.mxu0 0.0
    %2490 = vmatpush1.msra.mxu0 0.0
    %2491 = vmatprep.subr.mxu0 0.0
    %2492 = vmatpush1.msra.mxu0 0.0
    %2493 = vmatprep.subr.mxu0 0.0
    %2494 = vmatpush1.msra.mxu0 0.0
    %2495 = vmatprep.subr.mxu0 0.0
    %2496 = vmatpush1.msra.mxu0 0.0
    %2497 = vmatprep.subr.mxu0 0.0
    %2498 = vmatpush1.msra.mxu0 0.0
    %2499 = vmatprep.subr.mxu0 0.0
    %2500 = vmatpush1.msra.mxu0 0.0
    %2501 = vmatprep.subr.mxu0 0.0
    %2502 = vmatpush1.msra.mxu0 0.0
    %2503 = vmatprep.subr.mxu0 0.0
    %2504 = vmatpush1.msra.mxu0 0.0
    %2505 = vmatprep.subr.mxu0 0.0
    %2506 = vmatpush1.msra.mxu0 0.0
    %2507 = vmatprep.subr.mxu0 0.0
    %2508 = vmatpush1.msra.mxu0 0.0
    %2509 = vmatprep.subr.mxu0 0.0
    %2510 = vmatpush1.msra.mxu0 0.0
    %2511 = vmatprep.subr.mxu0 0.0
    %2512 = vmatpush1.msra.mxu0 0.0
    %2513 = vmatprep.subr.mxu0 0.0
    %2514 = vmatpush1.msra.mxu0 0.0
    %2515 = vmatprep.subr.mxu0 0.0
    %2516 = vmatpush1.msra.mxu0 0.0
    %2517 = vmatprep.subr.mxu0 0.0
    %2518 = vmatpush1.msra.mxu0 0.0
    %2519 = vmatprep.subr.mxu0 0.0
    %2520 = vmatpush1.msra.mxu0 0.0
    %2521 = vmatprep.subr.mxu0 0.0
    %2522 = vmatpush1.msra.mxu0 0.0
    %2523 = vmatprep.subr.mxu0 0.0
    %2524 = vmatpush1.msra.mxu0 0.0
    %2525 = vmatprep.subr.mxu0 0.0
    %2526 = vmatpush1.msra.mxu0 0.0
    %2527 = vmatprep.subr.mxu0 0.0
    %2528 = vmatpush1.msra.mxu0 0.0
    %2529 = vmatprep.mubr.f32.mxu0 0.0
    %2530 = vmatmul.mubr.f32.gmra.mrb[0].mxu0 %v2463
    %v2531 = vpop.f32.mrb[0].mxu0
    %v2532 = vadd.f32 0.0, %v2531
    %v2533 = vpop.f32.mrb[0].mxu0
    %2534 = vdwg.mxu0
    %v2535 = vmul.f32 %v66, %v2532
    %v2536 = vadd.f32 %v2303, %v2535
    %v2537 = vtanh.pop %v2536
    %v2538 = vadd.f32 %v2461, %v2537
    %v2539 = vmul.f32 %v68, %v2538
    %v2540 = vadd.f32 %v2232, %v2539
    %2541 = vst.msk [vmem:[#allocation9] sm:$0xff] %vm76, %v2540
    // Predicated region
    $region30: #{tpu_custom_call.1} parent=1 // pred_check
      _
    $region31: #{tpu_custom_call.1} parent=1 // pred_check_branch
      %2543 = sbr.rel (0) target = $region33
    $region32: #{tpu_custom_call.1} parent=1 // pred_region
      %s2545 = ssub.s32 128, 128
      %2546 = vsyncadd [#allocation4], %s2545
      %s2548 = sshll.u32 [#allocation9], 4
      %s2549 = int_to_ptr.vmem [resolvable:$true] %s2548
      %2551 = dma.vmem_to_hbm [thread:$0]  %s2549, 128, %s4, [#allocation4]
    $region33: #{tpu_custom_call.1} parent=1 // pred_fallthru
      _
    // Predicated region
    $region34: #{tpu_custom_call.1} parent=1 // pred_check
      _
    $region35: #{tpu_custom_call.1} parent=1 // pred_check_branch
      %2553 = sbr.rel (0) target = $region37
    $region36: #{tpu_custom_call.1} parent=1 // pred_region
      %2554 = dma.done [#allocation4], 128
    $region37: #{tpu_custom_call.1} parent=1 // pred_fallthru
      _
    %2555 = vsyncpa [#allocation3], 1
    %2556 = vsyncpa [#allocation8], 1
    %2557 = vsyncpa [#allocation4], 1
    %2558 = vsyncpa [#allocation5], 1

</llo_original>
